<compile_context>
chip_gen: v6e
topology: v6e:2x2x1
jax: 0.10.0
libtpu: 0.0.40
codegen_flags: <defaults>
</compile_context>

<pallas_src>
import jax
import jax.numpy as jnp
import numpy as np
from jax.experimental import pallas as pl
from jax.experimental.pallas import tpu as pltpu

IN_DIM = 784                 # 28 x 28 image, flattened
HIDDEN = [128, 64]           # default hidden_layers of Toy_Enc_Dec

H1 = 128                     # first hidden width (already lane aligned)
H2_PAD = 128                 # 64 -> 128 (zero-padded bottleneck, exact math)

MAX_BATCH_TILE = 1024        # larger tile amortizes ~0.35 us/step grid overhead
_ROW_ALIGN = 8               # f32 I/O blocks: 8 sublanes per vreg
COMPUTE_DTYPE = jnp.bfloat16 # MXU-input dtype (f32 accumulation everywhere)


def _round_up(n, m):
    return ((n + m - 1) // m) * m


def _num_tensorcores():
    """2 TCs per chip on v7x; 1 on v5e/v6e. Conservative fallback to 1."""
    try:
        kind = jax.devices()[0].device_kind.lower().replace(" ", "")
        if "v7" in kind or "tpu7" in kind:
            return 2
    except Exception:
        pass
    return 1


def _choose_batch_tile(batch):
    """Pick (batch_tile, n_tiles).

    Single-TC chips (v5e/v6e): one tile whenever it fits (grid is a serial
    loop there, extra steps are pure overhead).  2-TC chips (v7x): keep the
    tile count a multiple of 2 so both TensorCores get equal work.
    """
    cores = _num_tensorcores()
    rows = _round_up(batch, _ROW_ALIGN)
    n_tiles = pl.cdiv(rows, MAX_BATCH_TILE)
    if cores > 1 and rows >= cores * _ROW_ALIGN:
        n_tiles = _round_up(n_tiles, cores)
    bt = _round_up(pl.cdiv(rows, n_tiles), _ROW_ALIGN)
    return bt, n_tiles


def _enc_dec_kernel(x_ref,
                    w1_ref, b1_ref,   # encoder Linear(784 -> 128)
                    w2_ref, b2_ref,   # encoder Linear(128 -> 64)  (padded 128x128)
                    w3_ref, b3_ref,   # decoder Linear(64 -> 128)  (padded 128x128)
                    w4_ref, b4_ref,   # decoder Linear(128 -> 784)
                    o_ref):
    # f32 HBM read; cast to bf16 in-register for the MXU (free vs. the old
    # wrapper-side cast+pad pass).  All matmuls accumulate in f32; bias/ReLU/
    # sigmoid run in f32 on the VPU/EUP.
    x = x_ref[...].astype(COMPUTE_DTYPE)

    h = jnp.dot(x, w1_ref[...], preferred_element_type=jnp.float32) + b1_ref[...]
    h = jnp.maximum(h, 0.0).astype(COMPUTE_DTYPE)

    h = jnp.dot(h, w2_ref[...], preferred_element_type=jnp.float32) + b2_ref[...]
    h = jnp.maximum(h, 0.0).astype(COMPUTE_DTYPE)

    h = jnp.dot(h, w3_ref[...], preferred_element_type=jnp.float32) + b3_ref[...]
    h = jnp.maximum(h, 0.0).astype(COMPUTE_DTYPE)

    y = jnp.dot(h, w4_ref[...], preferred_element_type=jnp.float32) + b4_ref[...]
    # sigmoid(y) == 0.5 * tanh(y/2) + 0.5 : single EUP transcendental, no f32
    # divide on the VALU (matters on v5e).  Stored directly as f32.
    o_ref[...] = (0.5 * jnp.tanh(0.5 * y) + 0.5).astype(o_ref.dtype)


def prepare_params(params):
    """Cast weights to bf16; zero-pad only the 64-wide bottleneck to 128."""
    (w1, b1), (w2, b2), (w3, b3), (w4, b4) = params

    def pad_w(w, rows, cols):
        w = w.astype(COMPUTE_DTYPE)
        return jnp.pad(w, ((0, rows - w.shape[0]), (0, cols - w.shape[1])))

    def pad_b(b, cols):
        b = b.astype(jnp.float32)
        return jnp.pad(b, ((0, 0), (0, cols - b.shape[1])))

    return (pad_w(w1, IN_DIM, H1),   pad_b(b1, H1),
            pad_w(w2, H1, H2_PAD),   pad_b(b2, H2_PAD),
            pad_w(w3, H2_PAD, H1),   pad_b(b3, H1),
            pad_w(w4, H1, IN_DIM),   pad_b(b4, IN_DIM))


def _vmem_limit_bytes(bt, prepped):
    """Derive the VMEM limit from the actual tile footprint (+ headroom)."""
    w_bytes = sum(int(np.prod(p.shape)) * p.dtype.itemsize for p in prepped)
    io_bytes = 2 * (2 * bt * IN_DIM * 4)     # x + out f32 blocks, double-buffered
    tmp_bytes = 3 * bt * IN_DIM * 4          # f32 pre-sigmoid + hidden temporaries
    return int(io_bytes + 2 * w_bytes + tmp_bytes + (8 << 20))


@jax.jit
def toy_enc_dec_forward(x, prepped_params):
    """x: (B, C, H, W) or (B, D) float32. Returns (B, IN_DIM) float32."""
    B = x.shape[0]
    x2d = x.reshape(B, -1)                   # nn.Flatten (pure view, no HBM pass)
    assert x2d.shape[1] == IN_DIM
    x2d = x2d.astype(jnp.float32)

    bt, n_tiles = _choose_batch_tile(B)
    B_pad = bt * n_tiles
    if B_pad != B:                           # row pad only when needed
        x2d = jnp.pad(x2d, ((0, B_pad - B), (0, 0)))

    w1, b1, w2, b2, w3, b3, w4, b4 = prepped_params

    x_map = lambda i: (i, 0)
    rep = lambda i: (0, 0)   # constant block index -> fetched once, not per step

    out = pl.pallas_call(
        _enc_dec_kernel,
        out_shape=jax.ShapeDtypeStruct((B_pad, IN_DIM), jnp.float32),
        grid=(n_tiles,),
        in_specs=[
            pl.BlockSpec((bt, IN_DIM), x_map),
            pl.BlockSpec((IN_DIM, H1), rep),  pl.BlockSpec((1, H1), rep),
            pl.BlockSpec((H1, H2_PAD), rep),  pl.BlockSpec((1, H2_PAD), rep),
            pl.BlockSpec((H2_PAD, H1), rep),  pl.BlockSpec((1, H1), rep),
            pl.BlockSpec((H1, IN_DIM), rep),  pl.BlockSpec((1, IN_DIM), rep),
        ],
        out_specs=pl.BlockSpec((bt, IN_DIM), x_map),
        compiler_params=pltpu.CompilerParams(
            dimension_semantics=("parallel",),
            vmem_limit_bytes=_vmem_limit_bytes(bt, prepped_params)),
    )(x2d, w1, b1, w2, b2, w3, b3, w4, b4)

    # Only the (optional) row padding needs slicing off; dtype is already f32.
    return out if B_pad == B else out[:B]


def init_params(key):
    """Deterministic init mimicking nn.Linear default: U(-1/sqrt(fan_in), +)."""
    layer_io = [(IN_DIM, HIDDEN[0]),
                (HIDDEN[0], HIDDEN[1]),
                (HIDDEN[1], HIDDEN[0]),
                (HIDDEN[0], IN_DIM)]
    params = []
    for (fan_in, fan_out) in layer_io:
        key, kw, kb = jax.random.split(key, 3)
        bound = 1.0 / np.sqrt(fan_in)
        w = jax.random.uniform(kw, (fan_in, fan_out), jnp.float32, -bound, bound)
        b = jax.random.uniform(kb, (1, fan_out), jnp.float32, -bound, bound)
        params.append((w, b))
    return params


def reference_forward(x, params):
    """Pure-JAX mirror of the kernel math (bf16 MXU inputs, f32 accumulation)."""
    B = x.shape[0]
    h = x.reshape(B, -1)
    (w1, b1), (w2, b2), (w3, b3), (w4, b4) = params

    def layer(h, w, b):
        return jnp.dot(h.astype(COMPUTE_DTYPE), w.astype(COMPUTE_DTYPE),
                       preferred_element_type=jnp.float32) + b.astype(jnp.float32)

    h = jnp.maximum(layer(h, w1, b1), 0.0).astype(COMPUTE_DTYPE)
    h = jnp.maximum(layer(h, w2, b2), 0.0).astype(COMPUTE_DTYPE)
    h = jnp.maximum(layer(h, w3, b3), 0.0).astype(COMPUTE_DTYPE)
    y = jax.nn.sigmoid(layer(h, w4, b4))
    return y.astype(jnp.float32)


if __name__ == "__main__":
    key = jax.random.PRNGKey(0)
    key, kx = jax.random.split(key)

    # small batch of (1, 28, 28) images; exercises tile selection on all chips
    x = jax.random.uniform(kx, (24, 1, 28, 28), jnp.float32)

    params = init_params(jax.random.PRNGKey(0))
    prepped = prepare_params(params)

    out = toy_enc_dec_forward(x, prepped)
    out = jax.block_until_ready(out)

    ref = jax.block_until_ready(reference_forward(x, params))
    assert out.shape == (24, IN_DIM)
    np.testing.assert_allclose(np.asarray(out), np.asarray(ref),
                               rtol=1e-2, atol=1e-2)
    print("KERNEL_OK")
</pallas_src>

<mosaic_0001>
module attributes {stable_mosaic.version = 11 : i64} {
  func.func @_enc_dec_kernel(%arg0: i32, %arg1: memref<24x784xf32, #tpu.memory_space<vmem>>, %arg2: memref<784x128xbf16, #tpu.memory_space<vmem>>, %arg3: memref<1x128xf32, #tpu.memory_space<vmem>>, %arg4: memref<128x128xbf16, #tpu.memory_space<vmem>>, %arg5: memref<1x128xf32, #tpu.memory_space<vmem>>, %arg6: memref<128x128xbf16, #tpu.memory_space<vmem>>, %arg7: memref<1x128xf32, #tpu.memory_space<vmem>>, %arg8: memref<128x784xbf16, #tpu.memory_space<vmem>>, %arg9: memref<1x784xf32, #tpu.memory_space<vmem>>, %arg10: memref<24x784xf32, #tpu.memory_space<vmem>>) attributes {dimension_semantics = [#tpu.dimension_semantics<parallel>], iteration_bounds = array<i64: 1>, scalar_prefetch = 0 : i64, scratch_operands = 0 : i64, tpu.core_type = #tpu.core_type<tc>, window_params = [{transform_indices = @transform_0, window_bounds = array<i64: 24, 784>}, {pipeline_mode = #tpu.pipeline_mode<synchronous>, transform_indices = @transform_1, window_bounds = array<i64: 784, 128>}, {pipeline_mode = #tpu.pipeline_mode<synchronous>, transform_indices = @transform_2, window_bounds = array<i64: 1, 128>}, {pipeline_mode = #tpu.pipeline_mode<synchronous>, transform_indices = @transform_3, window_bounds = array<i64: 128, 128>}, {pipeline_mode = #tpu.pipeline_mode<synchronous>, transform_indices = @transform_4, window_bounds = array<i64: 1, 128>}, {pipeline_mode = #tpu.pipeline_mode<synchronous>, transform_indices = @transform_5, window_bounds = array<i64: 128, 128>}, {pipeline_mode = #tpu.pipeline_mode<synchronous>, transform_indices = @transform_6, window_bounds = array<i64: 1, 128>}, {pipeline_mode = #tpu.pipeline_mode<synchronous>, transform_indices = @transform_7, window_bounds = array<i64: 128, 784>}, {pipeline_mode = #tpu.pipeline_mode<synchronous>, transform_indices = @transform_8, window_bounds = array<i64: 1, 784>}, {transform_indices = @transform_9, window_bounds = array<i64: 24, 784>}]} {
    %c0 = arith.constant 0 : index
    %c0_0 = arith.constant 0 : index
    %0 = vector.load %arg1[%c0, %c0_0] : memref<24x784xf32, #tpu.memory_space<vmem>>, vector<24x784xf32>
    %1 = arith.truncf %0 : vector<24x784xf32> to vector<24x784xbf16>
    %c0_1 = arith.constant 0 : index
    %c0_2 = arith.constant 0 : index
    %2 = vector.load %arg2[%c0_1, %c0_2] : memref<784x128xbf16, #tpu.memory_space<vmem>>, vector<784x128xbf16>
    %cst = arith.constant dense<0.000000e+00> : vector<24x128xf32>
    %3 = tpu.matmul %1, %2, %cst {dimension_numbers = #tpu.dot_dimension_numbers<[1], [0], [0], [1], [0, 0, 1, 1], [], []>} : vector<24x784xbf16>, vector<784x128xbf16>, vector<24x128xf32> -> vector<24x128xf32>
    %c0_3 = arith.constant 0 : index
    %c0_4 = arith.constant 0 : index
    %4 = vector.load %arg3[%c0_3, %c0_4] : memref<1x128xf32, #tpu.memory_space<vmem>>, vector<1x128xf32>
    %5 = vector.broadcast %4 : vector<1x128xf32> to vector<24x128xf32>
    %6 = arith.addf %3, %5 : vector<24x128xf32>
    %cst_5 = arith.constant 0.000000e+00 : f32
    %7 = vector.broadcast %cst_5 : f32 to vector<24x128xf32>
    %8 = arith.maximumf %6, %7 : vector<24x128xf32>
    %9 = arith.truncf %8 : vector<24x128xf32> to vector<24x128xbf16>
    %c0_6 = arith.constant 0 : index
    %c0_7 = arith.constant 0 : index
    %10 = vector.load %arg4[%c0_6, %c0_7] : memref<128x128xbf16, #tpu.memory_space<vmem>>, vector<128x128xbf16>
    %cst_8 = arith.constant dense<0.000000e+00> : vector<24x128xf32>
    %11 = tpu.matmul %9, %10, %cst_8 {dimension_numbers = #tpu.dot_dimension_numbers<[1], [0], [0], [1], [0, 0, 1, 1], [], []>} : vector<24x128xbf16>, vector<128x128xbf16>, vector<24x128xf32> -> vector<24x128xf32>
    %c0_9 = arith.constant 0 : index
    %c0_10 = arith.constant 0 : index
    %12 = vector.load %arg5[%c0_9, %c0_10] : memref<1x128xf32, #tpu.memory_space<vmem>>, vector<1x128xf32>
    %13 = vector.broadcast %12 : vector<1x128xf32> to vector<24x128xf32>
    %14 = arith.addf %11, %13 : vector<24x128xf32>
    %cst_11 = arith.constant 0.000000e+00 : f32
    %15 = vector.broadcast %cst_11 : f32 to vector<24x128xf32>
    %16 = arith.maximumf %14, %15 : vector<24x128xf32>
    %17 = arith.truncf %16 : vector<24x128xf32> to vector<24x128xbf16>
    %c0_12 = arith.constant 0 : index
    %c0_13 = arith.constant 0 : index
    %18 = vector.load %arg6[%c0_12, %c0_13] : memref<128x128xbf16, #tpu.memory_space<vmem>>, vector<128x128xbf16>
    %cst_14 = arith.constant dense<0.000000e+00> : vector<24x128xf32>
    %19 = tpu.matmul %17, %18, %cst_14 {dimension_numbers = #tpu.dot_dimension_numbers<[1], [0], [0], [1], [0, 0, 1, 1], [], []>} : vector<24x128xbf16>, vector<128x128xbf16>, vector<24x128xf32> -> vector<24x128xf32>
    %c0_15 = arith.constant 0 : index
    %c0_16 = arith.constant 0 : index
    %20 = vector.load %arg7[%c0_15, %c0_16] : memref<1x128xf32, #tpu.memory_space<vmem>>, vector<1x128xf32>
    %21 = vector.broadcast %20 : vector<1x128xf32> to vector<24x128xf32>
    %22 = arith.addf %19, %21 : vector<24x128xf32>
    %cst_17 = arith.constant 0.000000e+00 : f32
    %23 = vector.broadcast %cst_17 : f32 to vector<24x128xf32>
    %24 = arith.maximumf %22, %23 : vector<24x128xf32>
    %25 = arith.truncf %24 : vector<24x128xf32> to vector<24x128xbf16>
    %c0_18 = arith.constant 0 : index
    %c0_19 = arith.constant 0 : index
    %26 = vector.load %arg8[%c0_18, %c0_19] : memref<128x784xbf16, #tpu.memory_space<vmem>>, vector<128x784xbf16>
    %cst_20 = arith.constant dense<0.000000e+00> : vector<24x784xf32>
    %27 = tpu.matmul %25, %26, %cst_20 {dimension_numbers = #tpu.dot_dimension_numbers<[1], [0], [0], [1], [0, 0, 1, 1], [], []>} : vector<24x128xbf16>, vector<128x784xbf16>, vector<24x784xf32> -> vector<24x784xf32>
    %c0_21 = arith.constant 0 : index
    %c0_22 = arith.constant 0 : index
    %28 = vector.load %arg9[%c0_21, %c0_22] : memref<1x784xf32, #tpu.memory_space<vmem>>, vector<1x784xf32>
    %29 = vector.broadcast %28 : vector<1x784xf32> to vector<24x784xf32>
    %30 = arith.addf %27, %29 : vector<24x784xf32>
    %cst_23 = arith.constant 5.000000e-01 : f32
    %31 = vector.broadcast %cst_23 : f32 to vector<24x784xf32>
    %32 = arith.mulf %31, %30 : vector<24x784xf32>
    %33 = math.tanh %32 : vector<24x784xf32>
    %cst_24 = arith.constant 5.000000e-01 : f32
    %34 = vector.broadcast %cst_24 : f32 to vector<24x784xf32>
    %35 = arith.mulf %34, %33 : vector<24x784xf32>
    %cst_25 = arith.constant 5.000000e-01 : f32
    %36 = vector.broadcast %cst_25 : f32 to vector<24x784xf32>
    %37 = arith.addf %35, %36 : vector<24x784xf32>
    %c0_26 = arith.constant 0 : index
    %c0_27 = arith.constant 0 : index
    %38 = vector.load %arg10[%c0_26, %c0_27] : memref<24x784xf32, #tpu.memory_space<vmem>>, vector<24x784xf32>
    tpu.vector_store %arg10[%c0_26, %c0_27], %37 {strides = array<i32>} : memref<24x784xf32, #tpu.memory_space<vmem>>, vector<24x784xf32>,
    return
  }
  func.func @transform_0(%arg0: i32) -> (i32, i32) {
    %c0_i32 = arith.constant 0 : i32
    %c0_i32_0 = arith.constant 0 : i32
    return %arg0, %c0_i32 : i32, i32
  }
  func.func @transform_1(%arg0: i32) -> (i32, i32) {
    %c0_i32 = arith.constant 0 : i32
    %c0_i32_0 = arith.constant 0 : i32
    %c0_i32_1 = arith.constant 0 : i32
    return %c0_i32, %c0_i32_0 : i32, i32
  }
  func.func @transform_2(%arg0: i32) -> (i32, i32) {
    %c0_i32 = arith.constant 0 : i32
    %c0_i32_0 = arith.constant 0 : i32
    %c0_i32_1 = arith.constant 0 : i32
    return %c0_i32, %c0_i32_0 : i32, i32
  }
  func.func @transform_3(%arg0: i32) -> (i32, i32) {
    %c0_i32 = arith.constant 0 : i32
    %c0_i32_0 = arith.constant 0 : i32
    %c0_i32_1 = arith.constant 0 : i32
    return %c0_i32, %c0_i32_0 : i32, i32
  }
  func.func @transform_4(%arg0: i32) -> (i32, i32) {
    %c0_i32 = arith.constant 0 : i32
    %c0_i32_0 = arith.constant 0 : i32
    %c0_i32_1 = arith.constant 0 : i32
    return %c0_i32, %c0_i32_0 : i32, i32
  }
  func.func @transform_5(%arg0: i32) -> (i32, i32) {
    %c0_i32 = arith.constant 0 : i32
    %c0_i32_0 = arith.constant 0 : i32
    %c0_i32_1 = arith.constant 0 : i32
    return %c0_i32, %c0_i32_0 : i32, i32
  }
  func.func @transform_6(%arg0: i32) -> (i32, i32) {
    %c0_i32 = arith.constant 0 : i32
    %c0_i32_0 = arith.constant 0 : i32
    %c0_i32_1 = arith.constant 0 : i32
    return %c0_i32, %c0_i32_0 : i32, i32
  }
  func.func @transform_7(%arg0: i32) -> (i32, i32) {
    %c0_i32 = arith.constant 0 : i32
    %c0_i32_0 = arith.constant 0 : i32
    %c0_i32_1 = arith.constant 0 : i32
    return %c0_i32, %c0_i32_0 : i32, i32
  }
  func.func @transform_8(%arg0: i32) -> (i32, i32) {
    %c0_i32 = arith.constant 0 : i32
    %c0_i32_0 = arith.constant 0 : i32
    %c0_i32_1 = arith.constant 0 : i32
    return %c0_i32, %c0_i32_0 : i32, i32
  }
  func.func @transform_9(%arg0: i32) -> (i32, i32) {
    %c0_i32 = arith.constant 0 : i32
    %c0_i32_0 = arith.constant 0 : i32
    return %arg0, %c0_i32 : i32, i32
  }
}

</mosaic_0001>

<llo_original>
// kernel: toy_enc_dec_forward.1
$region0: #{toy_enc_dec_forward.1}
  #allocation0 [shape = 'u32[]', space=smem, size = 0x4, offset = 0x4, fixed_abs, tag = 'smem constant byte address 0x4 - core index']
  #allocation1 [shape = 'u32[144,128]{1,0:T(1,128)}', space=vmem, size = 0x12000, scoped, tag = 'internal scratch']
  %s0 = inlined_call_operand.vmem [shape: f32[24,784], index: 0, kind: input, shape index: {}]
  %s1 = inlined_call_operand.vmem [shape: bf16[784,128], index: 1, kind: input, shape index: {}]
  %s2 = inlined_call_operand.vmem [shape: f32[1,128], index: 2, kind: input, shape index: {}]
  %s3 = inlined_call_operand.vmem [shape: bf16[128,128], index: 3, kind: input, shape index: {}]
  %s4 = inlined_call_operand.vmem [shape: f32[1,128], index: 4, kind: input, shape index: {}]
  %s5 = inlined_call_operand.vmem [shape: bf16[128,128], index: 5, kind: input, shape index: {}]
  %s6 = inlined_call_operand.vmem [shape: f32[1,128], index: 6, kind: input, shape index: {}]
  %s7 = inlined_call_operand.vmem [shape: bf16[128,784], index: 7, kind: input, shape index: {}]
  %s8 = inlined_call_operand.vmem [shape: f32[1,784], index: 8, kind: input, shape index: {}]
  %s9 = inlined_call_operand.hbm [shape: f32[24,784], index: 9, kind: output, shape index: {}]
  %s10 = sld [smem:[#allocation0]]
  $region46: #{toy_enc_dec_forward.1} parent=0
    _
  %s12 = ssub.s32 1, %s10
  %s13 = scalar_select 0, %s12, %s10
  $region1: #{toy_enc_dec_forward.1} parent=0
    #allocation2 [shape = 'u8[86016]{0}', space=vmem, size = 0x15000, scoped, tag = 'output window, operand 0, single buffered']
    #allocation3 [shape = 's32[1]{0}', space=sflag, size = 0x4, scoped, tag = 'scoped memory for toy_enc_dec_forward.1']
    %14 = vsyncpa [#allocation3], 0
    // Predicated region
    $region2: #{toy_enc_dec_forward.1} parent=1 // pred_check
      _
    $region3: #{toy_enc_dec_forward.1} parent=1 // pred_check_branch
      %16 = sbr.rel (0) target = $region5
    $region4: #{toy_enc_dec_forward.1} parent=1 // pred_region
      _
    $region5: #{toy_enc_dec_forward.1} parent=1 // pred_fallthru
      _
    // Predicated region
    $region6: #{toy_enc_dec_forward.1} parent=1 // pred_check
      _
    $region7: #{toy_enc_dec_forward.1} parent=1 // pred_check_branch
      %18 = sbr.rel (0) target = $region9
    $region8: #{toy_enc_dec_forward.1} parent=1 // pred_region
      _
    $region9: #{toy_enc_dec_forward.1} parent=1 // pred_fallthru
      _
    // Predicated region
    $region10: #{toy_enc_dec_forward.1} parent=1 // pred_check
      _
    $region11: #{toy_enc_dec_forward.1} parent=1 // pred_check_branch
      %20 = sbr.rel (0) target = $region13
    $region12: #{toy_enc_dec_forward.1} parent=1 // pred_region
      _
    $region13: #{toy_enc_dec_forward.1} parent=1 // pred_fallthru
      _
    // Predicated region
    $region14: #{toy_enc_dec_forward.1} parent=1 // pred_check
      _
    $region15: #{toy_enc_dec_forward.1} parent=1 // pred_check_branch
      %22 = sbr.rel (0) target = $region17
    $region16: #{toy_enc_dec_forward.1} parent=1 // pred_region
      _
    $region17: #{toy_enc_dec_forward.1} parent=1 // pred_fallthru
      _
    // Predicated region
    $region18: #{toy_enc_dec_forward.1} parent=1 // pred_check
      _
    $region19: #{toy_enc_dec_forward.1} parent=1 // pred_check_branch
      %24 = sbr.rel (0) target = $region21
    $region20: #{toy_enc_dec_forward.1} parent=1 // pred_region
      _
    $region21: #{toy_enc_dec_forward.1} parent=1 // pred_fallthru
      _
    // Predicated region
    $region22: #{toy_enc_dec_forward.1} parent=1 // pred_check
      _
    $region23: #{toy_enc_dec_forward.1} parent=1 // pred_check_branch
      %26 = sbr.rel (0) target = $region25
    $region24: #{toy_enc_dec_forward.1} parent=1 // pred_region
      _
    $region25: #{toy_enc_dec_forward.1} parent=1 // pred_fallthru
      _
    // Predicated region
    $region26: #{toy_enc_dec_forward.1} parent=1 // pred_check
      _
    $region27: #{toy_enc_dec_forward.1} parent=1 // pred_check_branch
      %28 = sbr.rel (0) target = $region29
    $region28: #{toy_enc_dec_forward.1} parent=1 // pred_region
      _
    $region29: #{toy_enc_dec_forward.1} parent=1 // pred_fallthru
      _
    // Predicated region
    $region30: #{toy_enc_dec_forward.1} parent=1 // pred_check
      _
    $region31: #{toy_enc_dec_forward.1} parent=1 // pred_check_branch
      %30 = sbr.rel (0) target = $region33
    $region32: #{toy_enc_dec_forward.1} parent=1 // pred_region
      _
    $region33: #{toy_enc_dec_forward.1} parent=1 // pred_fallthru
      _
    // Predicated region
    $region34: #{toy_enc_dec_forward.1} parent=1 // pred_check
      _
    $region35: #{toy_enc_dec_forward.1} parent=1 // pred_check_branch
      %32 = sbr.rel (0) target = $region37
    $region36: #{toy_enc_dec_forward.1} parent=1 // pred_region
      _
    $region37: #{toy_enc_dec_forward.1} parent=1 // pred_fallthru
      _
    %v34 = vld [vmem:[%s0] sm:$0xff]
    %v35 = vld [vmem:[%s0 + $0x8] sm:$0xff]
    %v36 = vld [vmem:[%s0 + $0x10] sm:$0xff]
    %v37 = vld [vmem:[%s0 + $0x18] sm:$0xff]
    %v38 = vld [vmem:[%s0 + $0x20] sm:$0xff]
    %v39 = vld [vmem:[%s0 + $0x28] sm:$0xff]
    %v40 = vld [vmem:[%s0 + $0x30] sm:$0xff]
    %v41 = vld [vmem:[%s0 + $0x38] sm:$0xff]
    %v42 = vld [vmem:[%s0 + $0x40] sm:$0xff]
    %v43 = vld [vmem:[%s0 + $0x48] sm:$0xff]
    %v44 = vld [vmem:[%s0 + $0x50] sm:$0xff]
    %v45 = vld [vmem:[%s0 + $0x58] sm:$0xff]
    %v46 = vld [vmem:[%s0 + $0x60] sm:$0xff]
    %v47 = vld [vmem:[%s0 + $0x68] sm:$0xff]
    %v48 = vld [vmem:[%s0 + $0x70] sm:$0xff]
    %v49 = vld [vmem:[%s0 + $0x78] sm:$0xff]
    %v50 = vld [vmem:[%s0 + $0x80] sm:$0xff]
    %v51 = vld [vmem:[%s0 + $0x88] sm:$0xff]
    %v52 = vld [vmem:[%s0 + $0x90] sm:$0xff]
    %v53 = vld [vmem:[%s0 + $0x98] sm:$0xff]
    %v54 = vld [vmem:[%s0 + $0xa0] sm:$0xff]
    %v55 = vpack.c.bf16 %v41, %v34
    %v56 = vpack.c.bf16 %v42, %v35
    %v57 = vpack.c.bf16 %v43, %v36
    %v58 = vpack.c.bf16 %v44, %v37
    %v59 = vpack.c.bf16 %v45, %v38
    %v60 = vpack.c.bf16 %v46, %v39
    %v61 = vpack.c.bf16 %v47, %v40
    %v62 = vpack.c.bf16 %v48, %v48
    %v63 = vpack.c.bf16 %v49, %v49
    %v64 = vpack.c.bf16 %v50, %v50
    %v65 = vpack.c.bf16 %v51, %v51
    %v66 = vpack.c.bf16 %v52, %v52
    %v67 = vpack.c.bf16 %v53, %v53
    %v68 = vpack.c.bf16 %v54, %v54
    %v69 = vld [vmem:[%s1] sm:$0xf]
    %v70 = vld [vmem:[%s1 + $0x4] sm:$0xf]
    %v71 = vld [vmem:[%s1 + $0x8] sm:$0xf]
    %v72 = vld [vmem:[%s1 + $0xc] sm:$0xf]
    %v73 = vld [vmem:[%s1 + $0x10] sm:$0xf]
    %v74 = vld [vmem:[%s1 + $0x14] sm:$0xf]
    %v75 = vld [vmem:[%s1 + $0x18] sm:$0xf]
    %v76 = vld [vmem:[%s1 + $0x1c] sm:$0xf]
    %v77 = vld [vmem:[%s1 + $0x20] sm:$0xf]
    %v78 = vld [vmem:[%s1 + $0x24] sm:$0xf]
    %v79 = vld [vmem:[%s1 + $0x28] sm:$0xf]
    %v80 = vld [vmem:[%s1 + $0x2c] sm:$0xf]
    %v81 = vld [vmem:[%s1 + $0x30] sm:$0xf]
    %v82 = vld [vmem:[%s1 + $0x34] sm:$0xf]
    %v83 = vld [vmem:[%s1 + $0x38] sm:$0xf]
    %v84 = vld [vmem:[%s1 + $0x3c] sm:$0xf]
    %v85 = vld [vmem:[%s1 + $0x40] sm:$0xf]
    %v86 = vld [vmem:[%s1 + $0x44] sm:$0xf]
    %v87 = vld [vmem:[%s1 + $0x48] sm:$0xf]
    %v88 = vld [vmem:[%s1 + $0x4c] sm:$0xf]
    %v89 = vld [vmem:[%s1 + $0x50] sm:$0xf]
    %v90 = vld [vmem:[%s1 + $0x54] sm:$0xf]
    %v91 = vld [vmem:[%s1 + $0x58] sm:$0xf]
    %v92 = vld [vmem:[%s1 + $0x5c] sm:$0xf]
    %v93 = vld [vmem:[%s1 + $0x60] sm:$0xf]
    %v94 = vld [vmem:[%s1 + $0x64] sm:$0xf]
    %v95 = vld [vmem:[%s1 + $0x68] sm:$0xf]
    %v96 = vld [vmem:[%s1 + $0x6c] sm:$0xf]
    %v97 = vld [vmem:[%s1 + $0x70] sm:$0xf]
    %v98 = vld [vmem:[%s1 + $0x74] sm:$0xf]
    %v99 = vld [vmem:[%s1 + $0x78] sm:$0xf]
    %v100 = vld [vmem:[%s1 + $0x7c] sm:$0xf]
    %v101 = vld [vmem:[%s1 + $0x80] sm:$0xf]
    %v102 = vld [vmem:[%s1 + $0x84] sm:$0xf]
    %v103 = vld [vmem:[%s1 + $0x88] sm:$0xf]
    %v104 = vld [vmem:[%s1 + $0x8c] sm:$0xf]
    %v105 = vld [vmem:[%s1 + $0x90] sm:$0xf]
    %v106 = vld [vmem:[%s1 + $0x94] sm:$0xf]
    %v107 = vld [vmem:[%s1 + $0x98] sm:$0xf]
    %v108 = vld [vmem:[%s1 + $0x9c] sm:$0xf]
    %v109 = vld [vmem:[%s1 + $0xa0] sm:$0xf]
    %v110 = vld [vmem:[%s1 + $0xa4] sm:$0xf]
    %v111 = vld [vmem:[%s1 + $0xa8] sm:$0xf]
    %v112 = vld [vmem:[%s1 + $0xac] sm:$0xf]
    %v113 = vld [vmem:[%s1 + $0xb0] sm:$0xf]
    %v114 = vld [vmem:[%s1 + $0xb4] sm:$0xf]
    %v115 = vld [vmem:[%s1 + $0xb8] sm:$0xf]
    %v116 = vld [vmem:[%s1 + $0xbc] sm:$0xf]
    %v117 = vld [vmem:[%s1 + $0xc0] sm:$0xf]
    %v118 = vld [vmem:[%s1 + $0xc4] sm:$0xf]
    %v119 = vld [vmem:[%s1 + $0xc8] sm:$0xf]
    %v120 = vld [vmem:[%s1 + $0xcc] sm:$0xf]
    %v121 = vld [vmem:[%s1 + $0xd0] sm:$0xf]
    %v122 = vld [vmem:[%s1 + $0xd4] sm:$0xf]
    %v123 = vld [vmem:[%s1 + $0xd8] sm:$0xf]
    %v124 = vld [vmem:[%s1 + $0xdc] sm:$0xf]
    %v125 = vld [vmem:[%s1 + $0xe0] sm:$0xf]
    %v126 = vld [vmem:[%s1 + $0xe4] sm:$0xf]
    %v127 = vld [vmem:[%s1 + $0xe8] sm:$0xf]
    %v128 = vld [vmem:[%s1 + $0xec] sm:$0xf]
    %v129 = vld [vmem:[%s1 + $0xf0] sm:$0xf]
    %v130 = vld [vmem:[%s1 + $0xf4] sm:$0xf]
    %v131 = vld [vmem:[%s1 + $0xf8] sm:$0xf]
    %v132 = vld [vmem:[%s1 + $0xfc] sm:$0xf]
    %v133 = vld [vmem:[%s1 + $0x100] sm:$0xf]
    %v134 = vld [vmem:[%s1 + $0x104] sm:$0xf]
    %v135 = vld [vmem:[%s1 + $0x108] sm:$0xf]
    %v136 = vld [vmem:[%s1 + $0x10c] sm:$0xf]
    %v137 = vld [vmem:[%s1 + $0x110] sm:$0xf]
    %v138 = vld [vmem:[%s1 + $0x114] sm:$0xf]
    %v139 = vld [vmem:[%s1 + $0x118] sm:$0xf]
    %v140 = vld [vmem:[%s1 + $0x11c] sm:$0xf]
    %v141 = vld [vmem:[%s1 + $0x120] sm:$0xf]
    %v142 = vld [vmem:[%s1 + $0x124] sm:$0xf]
    %v143 = vld [vmem:[%s1 + $0x128] sm:$0xf]
    %v144 = vld [vmem:[%s1 + $0x12c] sm:$0xf]
    %v145 = vld [vmem:[%s1 + $0x130] sm:$0xf]
    %v146 = vld [vmem:[%s1 + $0x134] sm:$0xf]
    %v147 = vld [vmem:[%s1 + $0x138] sm:$0xf]
    %v148 = vld [vmem:[%s1 + $0x13c] sm:$0xf]
    %v149 = vld [vmem:[%s1 + $0x140] sm:$0xf]
    %v150 = vld [vmem:[%s1 + $0x144] sm:$0xf]
    %v151 = vld [vmem:[%s1 + $0x148] sm:$0xf]
    %v152 = vld [vmem:[%s1 + $0x14c] sm:$0xf]
    %v153 = vld [vmem:[%s1 + $0x150] sm:$0xf]
    %v154 = vld [vmem:[%s1 + $0x154] sm:$0xf]
    %v155 = vld [vmem:[%s1 + $0x158] sm:$0xf]
    %v156 = vld [vmem:[%s1 + $0x15c] sm:$0xf]
    %v157 = vld [vmem:[%s1 + $0x160] sm:$0xf]
    %v158 = vld [vmem:[%s1 + $0x164] sm:$0xf]
    %v159 = vld [vmem:[%s1 + $0x168] sm:$0xf]
    %v160 = vld [vmem:[%s1 + $0x16c] sm:$0xf]
    %v161 = vld [vmem:[%s1 + $0x170] sm:$0xf]
    %v162 = vld [vmem:[%s1 + $0x174] sm:$0xf]
    %v163 = vld [vmem:[%s1 + $0x178] sm:$0xf]
    %v164 = vld [vmem:[%s1 + $0x17c] sm:$0xf]
    %v165 = vld [vmem:[%s1 + $0x180] sm:$0xf]
    %v166 = vld [vmem:[%s1 + $0x184] sm:$0xf]
    %v167 = vld [vmem:[%s2] sm:$0x1]
    %v169 = vlaneseq
    %v170 = vshrl.u32 %v169, 7
    %v171 = vsub.s32 0, %v170
    %v172 = vrot.slane %v167, %v171
    %v272 = vunpack.c.l.b16 %v69
    %v273 = vunpack.c.l.b16 %v70
    %v274 = vunpack.c.l.b16 %v71
    %v275 = vunpack.c.l.b16 %v72
    %v276 = vunpack.c.l.b16 %v73
    %v277 = vunpack.c.l.b16 %v74
    %v278 = vunpack.c.l.b16 %v75
    %v279 = vunpack.c.l.b16 %v76
    %v280 = vunpack.c.l.b16 %v77
    %v281 = vunpack.c.l.b16 %v78
    %v282 = vunpack.c.l.b16 %v79
    %v283 = vunpack.c.l.b16 %v80
    %v284 = vunpack.c.l.b16 %v81
    %v285 = vunpack.c.l.b16 %v82
    %v286 = vunpack.c.l.b16 %v83
    %v287 = vunpack.c.l.b16 %v84
    %v288 = vunpack.c.l.b16 %v85
    %v289 = vunpack.c.l.b16 %v86
    %v290 = vunpack.c.l.b16 %v87
    %v291 = vunpack.c.l.b16 %v88
    %v292 = vunpack.c.l.b16 %v89
    %v293 = vunpack.c.l.b16 %v90
    %v294 = vunpack.c.l.b16 %v91
    %v295 = vunpack.c.l.b16 %v92
    %v296 = vunpack.c.l.b16 %v93
    %v297 = vunpack.c.l.b16 %v94
    %v298 = vunpack.c.l.b16 %v95
    %v299 = vunpack.c.l.b16 %v96
    %v300 = vunpack.c.l.b16 %v97
    %v301 = vunpack.c.l.b16 %v98
    %v302 = vunpack.c.l.b16 %v99
    %v303 = vunpack.c.l.b16 %v100
    %v304 = vunpack.c.l.b16 %v101
    %v305 = vunpack.c.l.b16 %v102
    %v306 = vunpack.c.l.b16 %v103
    %v307 = vunpack.c.l.b16 %v104
    %v308 = vunpack.c.l.b16 %v105
    %v309 = vunpack.c.l.b16 %v106
    %v310 = vunpack.c.l.b16 %v107
    %v311 = vunpack.c.l.b16 %v108
    %v312 = vunpack.c.l.b16 %v109
    %v313 = vunpack.c.l.b16 %v110
    %v314 = vunpack.c.l.b16 %v111
    %v315 = vunpack.c.l.b16 %v112
    %v316 = vunpack.c.l.b16 %v113
    %v317 = vunpack.c.l.b16 %v114
    %v318 = vunpack.c.l.b16 %v115
    %v319 = vunpack.c.l.b16 %v116
    %v320 = vunpack.c.l.b16 %v117
    %v321 = vunpack.c.l.b16 %v118
    %v322 = vunpack.c.l.b16 %v119
    %v323 = vunpack.c.l.b16 %v120
    %v324 = vunpack.c.l.b16 %v121
    %v325 = vunpack.c.l.b16 %v122
    %v326 = vunpack.c.l.b16 %v123
    %v327 = vunpack.c.l.b16 %v124
    %v328 = vunpack.c.l.b16 %v125
    %v329 = vunpack.c.l.b16 %v126
    %v330 = vunpack.c.l.b16 %v127
    %v331 = vunpack.c.l.b16 %v128
    %v332 = vunpack.c.l.b16 %v129
    %v333 = vunpack.c.l.b16 %v130
    %v334 = vunpack.c.l.b16 %v131
    %v335 = vunpack.c.l.b16 %v132
    %v336 = vunpack.c.l.b16 %v133
    %v337 = vunpack.c.l.b16 %v134
    %v338 = vunpack.c.l.b16 %v135
    %v339 = vunpack.c.l.b16 %v136
    %v340 = vunpack.c.l.b16 %v137
    %v341 = vunpack.c.l.b16 %v138
    %v342 = vunpack.c.l.b16 %v139
    %v343 = vunpack.c.l.b16 %v140
    %v344 = vunpack.c.l.b16 %v141
    %v345 = vunpack.c.l.b16 %v142
    %v346 = vunpack.c.l.b16 %v143
    %v347 = vunpack.c.l.b16 %v144
    %v348 = vunpack.c.l.b16 %v145
    %v349 = vunpack.c.l.b16 %v146
    %v350 = vunpack.c.l.b16 %v147
    %v351 = vunpack.c.l.b16 %v148
    %v352 = vunpack.c.l.b16 %v149
    %v353 = vunpack.c.l.b16 %v150
    %v354 = vunpack.c.l.b16 %v151
    %v355 = vunpack.c.l.b16 %v152
    %v356 = vunpack.c.l.b16 %v153
    %v357 = vunpack.c.l.b16 %v154
    %v358 = vunpack.c.l.b16 %v155
    %v359 = vunpack.c.l.b16 %v156
    %v360 = vunpack.c.l.b16 %v157
    %v361 = vunpack.c.l.b16 %v158
    %v362 = vunpack.c.l.b16 %v159
    %v363 = vunpack.c.l.b16 %v160
    %v364 = vunpack.c.l.b16 %v161
    %v365 = vunpack.c.l.b16 %v162
    %v366 = vunpack.c.l.b16 %v163
    %v367 = vunpack.c.l.b16 %v164
    %v368 = vunpack.c.l.b16 %v165
    %v369 = vunpack.c.l.b16 %v166
    %v370 = vpack.c.b16 %v273, %v272
    %v371 = vpack.c.b16 %v275, %v274
    %v372 = vpack.c.b16 %v277, %v276
    %v373 = vpack.c.b16 %v279, %v278
    %v374 = vpack.c.b16 %v281, %v280
    %v375 = vpack.c.b16 %v283, %v282
    %v376 = vpack.c.b16 %v285, %v284
    %v377 = vpack.c.b16 %v287, %v286
    %v378 = vpack.c.b16 %v289, %v288
    %v379 = vpack.c.b16 %v291, %v290
    %v380 = vpack.c.b16 %v293, %v292
    %v381 = vpack.c.b16 %v295, %v294
    %v382 = vpack.c.b16 %v297, %v296
    %v383 = vpack.c.b16 %v299, %v298
    %v384 = vpack.c.b16 %v301, %v300
    %v385 = vpack.c.b16 %v303, %v302
    %v386 = vpack.c.b16 %v305, %v304
    %v387 = vpack.c.b16 %v307, %v306
    %v388 = vpack.c.b16 %v309, %v308
    %v389 = vpack.c.b16 %v311, %v310
    %v390 = vpack.c.b16 %v313, %v312
    %v391 = vpack.c.b16 %v315, %v314
    %v392 = vpack.c.b16 %v317, %v316
    %v393 = vpack.c.b16 %v319, %v318
    %v394 = vpack.c.b16 %v321, %v320
    %v395 = vpack.c.b16 %v323, %v322
    %v396 = vpack.c.b16 %v325, %v324
    %v397 = vpack.c.b16 %v327, %v326
    %v398 = vpack.c.b16 %v329, %v328
    %v399 = vpack.c.b16 %v331, %v330
    %v400 = vpack.c.b16 %v333, %v332
    %v401 = vpack.c.b16 %v335, %v334
    %v402 = vpack.c.b16 %v337, %v336
    %v403 = vpack.c.b16 %v339, %v338
    %v404 = vpack.c.b16 %v341, %v340
    %v405 = vpack.c.b16 %v343, %v342
    %v406 = vpack.c.b16 %v345, %v344
    %v407 = vpack.c.b16 %v347, %v346
    %v408 = vpack.c.b16 %v349, %v348
    %v409 = vpack.c.b16 %v351, %v350
    %v410 = vpack.c.b16 %v353, %v352
    %v411 = vpack.c.b16 %v355, %v354
    %v412 = vpack.c.b16 %v357, %v356
    %v413 = vpack.c.b16 %v359, %v358
    %v414 = vpack.c.b16 %v361, %v360
    %v415 = vpack.c.b16 %v363, %v362
    %v416 = vpack.c.b16 %v365, %v364
    %v417 = vpack.c.b16 %v367, %v366
    %v418 = vpack.c.b16 %v369, %v368
    %vm468 = vcmask 130048
    %v470 = vsel %vm468, %v61, 0
    %v473 = vsel %vm468, %v68, 0
    %475 = vmatprep.subr.bf16.mxu0 0
    %476 = vmatpush1.bf16.msra.mxu0 %v377
    %477 = vmatprep.subr.bf16.mxu0 0
    %478 = vmatpush1.bf16.msra.mxu0 %v376
    %479 = vmatprep.subr.bf16.mxu0 0
    %480 = vmatpush1.bf16.msra.mxu0 %v375
    %481 = vmatprep.subr.bf16.mxu0 0
    %482 = vmatpush1.bf16.msra.mxu0 %v374
    %483 = vmatprep.subr.bf16.mxu0 0
    %484 = vmatpush1.bf16.msra.mxu0 %v373
    %485 = vmatprep.subr.bf16.mxu0 0
    %486 = vmatpush1.bf16.msra.mxu0 %v372
    %487 = vmatprep.subr.bf16.mxu0 0
    %488 = vmatpush1.bf16.msra.mxu0 %v371
    %489 = vmatprep.subr.bf16.mxu0 0
    %490 = vmatpush1.bf16.msra.mxu0 %v370
    %491 = vmatprep.subr.bf16.mxu0 0
    %492 = vmatpush2.bf16.msra.mxu0 %v385
    %493 = vmatprep.subr.bf16.mxu0 0
    %494 = vmatpush2.bf16.msra.mxu0 %v384
    %495 = vmatprep.subr.bf16.mxu0 0
    %496 = vmatpush2.bf16.msra.mxu0 %v383
    %497 = vmatprep.subr.bf16.mxu0 0
    %498 = vmatpush2.bf16.msra.mxu0 %v382
    %499 = vmatprep.subr.bf16.mxu0 0
    %500 = vmatpush2.bf16.msra.mxu0 %v381
    %501 = vmatprep.subr.bf16.mxu0 0
    %502 = vmatpush2.bf16.msra.mxu0 %v380
    %503 = vmatprep.subr.bf16.mxu0 0
    %504 = vmatpush2.bf16.msra.mxu0 %v379
    %505 = vmatprep.subr.bf16.mxu0 0
    %506 = vmatpush2.bf16.msra.mxu0 %v378
    %507 = vmatprep.mubr.bf16.mxu0 %v56
    %508 = vmatmul.mubr.bf16.gmra.mxu0 %v55
    %v509 = vpop.f32.mrf.mxu0
    %v510 = vadd.f32 %v172, %v509
    %v511 = vpop.f32.mrf.mxu0
    %v512 = vpop.f32.mrf.mxu0
    %v513 = vadd.f32 %v172, %v512
    %v514 = vpop.f32.mrf.mxu0
    %515 = vmatprep.mubr.bf16.mxu0 %v63
    %516 = vmatmul.mubr.bf16.gmra.mxu0 %v62
    %v517 = vpop.f32.mrf.mxu0
    %v518 = vadd.f32 %v172, %v517
    %v519 = vpop.f32.mrf.mxu0
    %v520 = vpop.f32.mrf.mxu0
    %v521 = vpop.f32.mrf.mxu0
    %522 = vdwg.mxu0
    %523 = vmatprep.subr.bf16.mxu0 0
    %524 = vmatpush1.bf16.msra.mxu0 %v393
    %525 = vmatprep.subr.bf16.mxu0 0
    %526 = vmatpush1.bf16.msra.mxu0 %v392
    %527 = vmatprep.subr.bf16.mxu0 0
    %528 = vmatpush1.bf16.msra.mxu0 %v391
    %529 = vmatprep.subr.bf16.mxu0 0
    %530 = vmatpush1.bf16.msra.mxu0 %v390
    %531 = vmatprep.subr.bf16.mxu0 0
    %532 = vmatpush1.bf16.msra.mxu0 %v389
    %533 = vmatprep.subr.bf16.mxu0 0
    %534 = vmatpush1.bf16.msra.mxu0 %v388
    %535 = vmatprep.subr.bf16.mxu0 0
    %536 = vmatpush1.bf16.msra.mxu0 %v387
    %537 = vmatprep.subr.bf16.mxu0 0
    %538 = vmatpush1.bf16.msra.mxu0 %v386
    %539 = vmatprep.subr.bf16.mxu0 0
    %540 = vmatpush2.bf16.msra.mxu0 %v401
    %541 = vmatprep.subr.bf16.mxu0 0
    %542 = vmatpush2.bf16.msra.mxu0 %v400
    %543 = vmatprep.subr.bf16.mxu0 0
    %544 = vmatpush2.bf16.msra.mxu0 %v399
    %545 = vmatprep.subr.bf16.mxu0 0
    %546 = vmatpush2.bf16.msra.mxu0 %v398
    %547 = vmatprep.subr.bf16.mxu0 0
    %548 = vmatpush2.bf16.msra.mxu0 %v397
    %549 = vmatprep.subr.bf16.mxu0 0
    %550 = vmatpush2.bf16.msra.mxu0 %v396
    %551 = vmatprep.subr.bf16.mxu0 0
    %552 = vmatpush2.bf16.msra.mxu0 %v395
    %553 = vmatprep.subr.bf16.mxu0 0
    %554 = vmatpush2.bf16.msra.mxu0 %v394
    %555 = vmatprep.mubr.bf16.mxu0 %v58
    %556 = vmatmul.mubr.bf16.gmra.mxu0 %v57
    %v557 = vpop.f32.mrf.mxu0
    %v558 = vadd.f32 %v510, %v557
    %v559 = vpop.f32.mrf.mxu0
    %v560 = vpop.f32.mrf.mxu0
    %v561 = vadd.f32 %v513, %v560
    %v562 = vpop.f32.mrf.mxu0
    %563 = vmatprep.mubr.bf16.mxu0 %v65
    %564 = vmatmul.mubr.bf16.gmra.mxu0 %v64
    %v565 = vpop.f32.mrf.mxu0
    %v566 = vadd.f32 %v518, %v565
    %v567 = vpop.f32.mrf.mxu0
    %v568 = vpop.f32.mrf.mxu0
    %v569 = vpop.f32.mrf.mxu0
    %570 = vdwg.mxu0
    %571 = vmatprep.subr.bf16.mxu0 0
    %572 = vmatpush1.bf16.msra.mxu0 %v409
    %573 = vmatprep.subr.bf16.mxu0 0
    %574 = vmatpush1.bf16.msra.mxu0 %v408
    %575 = vmatprep.subr.bf16.mxu0 0
    %576 = vmatpush1.bf16.msra.mxu0 %v407
    %577 = vmatprep.subr.bf16.mxu0 0
    %578 = vmatpush1.bf16.msra.mxu0 %v406
    %579 = vmatprep.subr.bf16.mxu0 0
    %580 = vmatpush1.bf16.msra.mxu0 %v405
    %581 = vmatprep.subr.bf16.mxu0 0
    %582 = vmatpush1.bf16.msra.mxu0 %v404
    %583 = vmatprep.subr.bf16.mxu0 0
    %584 = vmatpush1.bf16.msra.mxu0 %v403
    %585 = vmatprep.subr.bf16.mxu0 0
    %586 = vmatpush1.bf16.msra.mxu0 %v402
    %587 = vmatprep.subr.bf16.mxu0 0
    %588 = vmatpush2.bf16.msra.mxu0 %v417
    %589 = vmatprep.subr.bf16.mxu0 0
    %590 = vmatpush2.bf16.msra.mxu0 %v416
    %591 = vmatprep.subr.bf16.mxu0 0
    %592 = vmatpush2.bf16.msra.mxu0 %v415
    %593 = vmatprep.subr.bf16.mxu0 0
    %594 = vmatpush2.bf16.msra.mxu0 %v414
    %595 = vmatprep.subr.bf16.mxu0 0
    %596 = vmatpush2.bf16.msra.mxu0 %v413
    %597 = vmatprep.subr.bf16.mxu0 0
    %598 = vmatpush2.bf16.msra.mxu0 %v412
    %599 = vmatprep.subr.bf16.mxu0 0
    %600 = vmatpush2.bf16.msra.mxu0 %v411
    %601 = vmatprep.subr.bf16.mxu0 0
    %602 = vmatpush2.bf16.msra.mxu0 %v410
    %603 = vmatprep.mubr.bf16.mxu0 %v60
    %604 = vmatmul.mubr.bf16.gmra.mxu0 %v59
    %v605 = vpop.f32.mrf.mxu0
    %v606 = vadd.f32 %v558, %v605
    %v607 = vpop.f32.mrf.mxu0
    %v608 = vpop.f32.mrf.mxu0
    %v609 = vadd.f32 %v561, %v608
    %v610 = vpop.f32.mrf.mxu0
    %611 = vmatprep.mubr.bf16.mxu0 %v67
    %612 = vmatmul.mubr.bf16.gmra.mxu0 %v66
    %v613 = vpop.f32.mrf.mxu0
    %v614 = vadd.f32 %v566, %v613
    %v615 = vpop.f32.mrf.mxu0
    %v616 = vpop.f32.mrf.mxu0
    %v617 = vpop.f32.mrf.mxu0
    %618 = vdwg.mxu0
    %619 = vmatprep.subr.bf16.mxu0 0
    %620 = vmatpush1.bf16.msra.mxu0 0
    %621 = vmatprep.subr.bf16.mxu0 0
    %622 = vmatpush1.bf16.msra.mxu0 0
    %623 = vmatprep.subr.bf16.mxu0 0
    %624 = vmatpush1.bf16.msra.mxu0 0
    %625 = vmatprep.subr.bf16.mxu0 0
    %626 = vmatpush1.bf16.msra.mxu0 0
    %627 = vmatprep.subr.bf16.mxu0 0
    %628 = vmatpush1.bf16.msra.mxu0 0
    %629 = vmatprep.subr.bf16.mxu0 0
    %630 = vmatpush1.bf16.msra.mxu0 0
    %631 = vmatprep.subr.bf16.mxu0 0
    %632 = vmatpush1.bf16.msra.mxu0 0
    %633 = vmatprep.subr.bf16.mxu0 0
    %634 = vmatpush1.bf16.msra.mxu0 %v418
    %635 = vmatprep.subr.bf16.mxu0 0
    %636 = vmatpush2.bf16.msra.mxu0 0
    %637 = vmatprep.subr.bf16.mxu0 0
    %638 = vmatpush2.bf16.msra.mxu0 0
    %639 = vmatprep.subr.bf16.mxu0 0
    %640 = vmatpush2.bf16.msra.mxu0 0
    %641 = vmatprep.subr.bf16.mxu0 0
    %642 = vmatpush2.bf16.msra.mxu0 0
    %643 = vmatprep.subr.bf16.mxu0 0
    %644 = vmatpush2.bf16.msra.mxu0 0
    %645 = vmatprep.subr.bf16.mxu0 0
    %646 = vmatpush2.bf16.msra.mxu0 0
    %647 = vmatprep.subr.bf16.mxu0 0
    %648 = vmatpush2.bf16.msra.mxu0 0
    %649 = vmatprep.subr.bf16.mxu0 0
    %650 = vmatpush2.bf16.msra.mxu0 0
    %651 = vmatprep.mubr.bf16.mxu0 0
    %652 = vmatmul.mubr.bf16.gmra.mxu0 %v470
    %v653 = vpop.f32.mrf.mxu0
    %v654 = vadd.f32 %v606, %v653
    %v655 = vpop.f32.mrf.mxu0
    %v656 = vpop.f32.mrf.mxu0
    %v657 = vadd.f32 %v609, %v656
    %v658 = vpop.f32.mrf.mxu0
    %659 = vmatprep.mubr.bf16.mxu0 0
    %660 = vmatmul.mubr.bf16.gmra.mxu0 %v473
    %v661 = vpop.f32.mrf.mxu0
    %v662 = vadd.f32 %v614, %v661
    %v663 = vpop.f32.mrf.mxu0
    %v664 = vpop.f32.mrf.mxu0
    %v665 = vpop.f32.mrf.mxu0
    %666 = vdwg.mxu0
    %v667 = vmax.f32 %v654, 0.0
    %v668 = vmax.f32 %v657, 0.0
    %v669 = vmax.f32 %v662, 0.0
    %v670 = vpack.c.bf16 %v668, %v667
    %v671 = vpack.c.bf16 %v669, %v669
    %v672 = vld [vmem:[%s3] sm:$0xf]
    %v673 = vld [vmem:[%s3 + $0x4] sm:$0xf]
    %v674 = vld [vmem:[%s3 + $0x8] sm:$0xf]
    %v675 = vld [vmem:[%s3 + $0xc] sm:$0xf]
    %v676 = vld [vmem:[%s3 + $0x10] sm:$0xf]
    %v677 = vld [vmem:[%s3 + $0x14] sm:$0xf]
    %v678 = vld [vmem:[%s3 + $0x18] sm:$0xf]
    %v679 = vld [vmem:[%s3 + $0x1c] sm:$0xf]
    %v680 = vld [vmem:[%s3 + $0x20] sm:$0xf]
    %v681 = vld [vmem:[%s3 + $0x24] sm:$0xf]
    %v682 = vld [vmem:[%s3 + $0x28] sm:$0xf]
    %v683 = vld [vmem:[%s3 + $0x2c] sm:$0xf]
    %v684 = vld [vmem:[%s3 + $0x30] sm:$0xf]
    %v685 = vld [vmem:[%s3 + $0x34] sm:$0xf]
    %v686 = vld [vmem:[%s3 + $0x38] sm:$0xf]
    %v687 = vld [vmem:[%s3 + $0x3c] sm:$0xf]
    %v688 = vld [vmem:[%s4] sm:$0x1]
    %v690 = vlaneseq
    %v691 = vshrl.u32 %v690, 7
    %v692 = vsub.s32 0, %v691
    %v693 = vrot.slane %v688, %v692
    %v711 = vunpack.c.l.b16 %v672
    %v712 = vunpack.c.l.b16 %v673
    %v713 = vunpack.c.l.b16 %v674
    %v714 = vunpack.c.l.b16 %v675
    %v715 = vunpack.c.l.b16 %v676
    %v716 = vunpack.c.l.b16 %v677
    %v717 = vunpack.c.l.b16 %v678
    %v718 = vunpack.c.l.b16 %v679
    %v719 = vunpack.c.l.b16 %v680
    %v720 = vunpack.c.l.b16 %v681
    %v721 = vunpack.c.l.b16 %v682
    %v722 = vunpack.c.l.b16 %v683
    %v723 = vunpack.c.l.b16 %v684
    %v724 = vunpack.c.l.b16 %v685
    %v725 = vunpack.c.l.b16 %v686
    %v726 = vunpack.c.l.b16 %v687
    %v727 = vpack.c.b16 %v712, %v711
    %v728 = vpack.c.b16 %v714, %v713
    %v729 = vpack.c.b16 %v716, %v715
    %v730 = vpack.c.b16 %v718, %v717
    %v731 = vpack.c.b16 %v720, %v719
    %v732 = vpack.c.b16 %v722, %v721
    %v733 = vpack.c.b16 %v724, %v723
    %v734 = vpack.c.b16 %v726, %v725
    %743 = vmatprep.subr.bf16.mxu0 0
    %744 = vmatpush1.bf16.msra.mxu0 %v734
    %745 = vmatprep.subr.bf16.mxu0 0
    %746 = vmatpush1.bf16.msra.mxu0 %v733
    %747 = vmatprep.subr.bf16.mxu0 0
    %748 = vmatpush1.bf16.msra.mxu0 %v732
    %749 = vmatprep.subr.bf16.mxu0 0
    %750 = vmatpush1.bf16.msra.mxu0 %v731
    %751 = vmatprep.subr.bf16.mxu0 0
    %752 = vmatpush1.bf16.msra.mxu0 %v730
    %753 = vmatprep.subr.bf16.mxu0 0
    %754 = vmatpush1.bf16.msra.mxu0 %v729
    %755 = vmatprep.subr.bf16.mxu0 0
    %756 = vmatpush1.bf16.msra.mxu0 %v728
    %757 = vmatprep.subr.bf16.mxu0 0
    %758 = vmatpush1.bf16.msra.mxu0 %v727
    %759 = vmatprep.subr.bf16.mxu0 0
    %760 = vmatpush2.bf16.msra.mxu0 0
    %761 = vmatprep.subr.bf16.mxu0 0
    %762 = vmatpush2.bf16.msra.mxu0 0
    %763 = vmatprep.subr.bf16.mxu0 0
    %764 = vmatpush2.bf16.msra.mxu0 0
    %765 = vmatprep.subr.bf16.mxu0 0
    %766 = vmatpush2.bf16.msra.mxu0 0
    %767 = vmatprep.subr.bf16.mxu0 0
    %768 = vmatpush2.bf16.msra.mxu0 0
    %769 = vmatprep.subr.bf16.mxu0 0
    %770 = vmatpush2.bf16.msra.mxu0 0
    %771 = vmatprep.subr.bf16.mxu0 0
    %772 = vmatpush2.bf16.msra.mxu0 0
    %773 = vmatprep.subr.bf16.mxu0 0
    %774 = vmatpush2.bf16.msra.mxu0 0
    %775 = vmatprep.mubr.bf16.mxu0 0
    %776 = vmatmul.mubr.bf16.gmra.mxu0 %v670
    %v777 = vpop.f32.mrf.mxu0
    %v778 = vadd.f32 %v693, %v777
    %v779 = vpop.f32.mrf.mxu0
    %v780 = vpop.f32.mrf.mxu0
    %v781 = vadd.f32 %v693, %v780
    %v782 = vpop.f32.mrf.mxu0
    %783 = vmatprep.mubr.bf16.mxu0 0
    %784 = vmatmul.mubr.bf16.gmra.mxu0 %v671
    %v785 = vpop.f32.mrf.mxu0
    %v786 = vadd.f32 %v693, %v785
    %v787 = vpop.f32.mrf.mxu0
    %v788 = vpop.f32.mrf.mxu0
    %v789 = vpop.f32.mrf.mxu0
    %790 = vdwg.mxu0
    %v791 = vmax.f32 %v778, 0.0
    %v792 = vmax.f32 %v781, 0.0
    %v793 = vmax.f32 %v786, 0.0
    %v794 = vpack.c.bf16 %v792, %v791
    %v795 = vpack.c.bf16 %v793, %v793
    %v796 = vld [vmem:[%s5] sm:$0xf]
    %v797 = vld [vmem:[%s5 + $0x4] sm:$0xf]
    %v798 = vld [vmem:[%s5 + $0x8] sm:$0xf]
    %v799 = vld [vmem:[%s5 + $0xc] sm:$0xf]
    %v800 = vld [vmem:[%s5 + $0x10] sm:$0xf]
    %v801 = vld [vmem:[%s5 + $0x14] sm:$0xf]
    %v802 = vld [vmem:[%s5 + $0x18] sm:$0xf]
    %v803 = vld [vmem:[%s5 + $0x1c] sm:$0xf]
    %v804 = vld [vmem:[%s5 + $0x20] sm:$0xf]
    %v805 = vld [vmem:[%s5 + $0x24] sm:$0xf]
    %v806 = vld [vmem:[%s5 + $0x28] sm:$0xf]
    %v807 = vld [vmem:[%s5 + $0x2c] sm:$0xf]
    %v808 = vld [vmem:[%s5 + $0x30] sm:$0xf]
    %v809 = vld [vmem:[%s5 + $0x34] sm:$0xf]
    %v810 = vld [vmem:[%s5 + $0x38] sm:$0xf]
    %v811 = vld [vmem:[%s5 + $0x3c] sm:$0xf]
    %v812 = vld [vmem:[%s6] sm:$0x1]
    %v814 = vlaneseq
    %v815 = vshrl.u32 %v814, 7
    %v816 = vsub.s32 0, %v815
    %v817 = vrot.slane %v812, %v816
    %v835 = vunpack.c.l.b16 %v796
    %v836 = vunpack.c.l.b16 %v797
    %v837 = vunpack.c.l.b16 %v798
    %v838 = vunpack.c.l.b16 %v799
    %v839 = vunpack.c.l.b16 %v800
    %v840 = vunpack.c.l.b16 %v801
    %v841 = vunpack.c.l.b16 %v802
    %v842 = vunpack.c.l.b16 %v803
    %v843 = vunpack.c.l.b16 %v804
    %v844 = vunpack.c.l.b16 %v805
    %v845 = vunpack.c.l.b16 %v806
    %v846 = vunpack.c.l.b16 %v807
    %v847 = vunpack.c.l.b16 %v808
    %v848 = vunpack.c.l.b16 %v809
    %v849 = vunpack.c.l.b16 %v810
    %v850 = vunpack.c.l.b16 %v811
    %v851 = vpack.c.b16 %v836, %v835
    %v852 = vpack.c.b16 %v838, %v837
    %v853 = vpack.c.b16 %v840, %v839
    %v854 = vpack.c.b16 %v842, %v841
    %v855 = vpack.c.b16 %v844, %v843
    %v856 = vpack.c.b16 %v846, %v845
    %v857 = vpack.c.b16 %v848, %v847
    %v858 = vpack.c.b16 %v850, %v849
    %867 = vmatprep.subr.bf16.mxu0 0
    %868 = vmatpush1.bf16.msra.mxu0 %v858
    %869 = vmatprep.subr.bf16.mxu0 0
    %870 = vmatpush1.bf16.msra.mxu0 %v857
    %871 = vmatprep.subr.bf16.mxu0 0
    %872 = vmatpush1.bf16.msra.mxu0 %v856
    %873 = vmatprep.subr.bf16.mxu0 0
    %874 = vmatpush1.bf16.msra.mxu0 %v855
    %875 = vmatprep.subr.bf16.mxu0 0
    %876 = vmatpush1.bf16.msra.mxu0 %v854
    %877 = vmatprep.subr.bf16.mxu0 0
    %878 = vmatpush1.bf16.msra.mxu0 %v853
    %879 = vmatprep.subr.bf16.mxu0 0
    %880 = vmatpush1.bf16.msra.mxu0 %v852
    %881 = vmatprep.subr.bf16.mxu0 0
    %882 = vmatpush1.bf16.msra.mxu0 %v851
    %883 = vmatprep.subr.bf16.mxu0 0
    %884 = vmatpush2.bf16.msra.mxu0 0
    %885 = vmatprep.subr.bf16.mxu0 0
    %886 = vmatpush2.bf16.msra.mxu0 0
    %887 = vmatprep.subr.bf16.mxu0 0
    %888 = vmatpush2.bf16.msra.mxu0 0
    %889 = vmatprep.subr.bf16.mxu0 0
    %890 = vmatpush2.bf16.msra.mxu0 0
    %891 = vmatprep.subr.bf16.mxu0 0
    %892 = vmatpush2.bf16.msra.mxu0 0
    %893 = vmatprep.subr.bf16.mxu0 0
    %894 = vmatpush2.bf16.msra.mxu0 0
    %895 = vmatprep.subr.bf16.mxu0 0
    %896 = vmatpush2.bf16.msra.mxu0 0
    %897 = vmatprep.subr.bf16.mxu0 0
    %898 = vmatpush2.bf16.msra.mxu0 0
    %899 = vmatprep.mubr.bf16.mxu0 0
    %900 = vmatmul.mubr.bf16.gmra.mxu0 %v794
    %v901 = vpop.f32.mrf.mxu0
    %v902 = vadd.f32 %v817, %v901
    %v903 = vpop.f32.mrf.mxu0
    %v904 = vpop.f32.mrf.mxu0
    %v905 = vadd.f32 %v817, %v904
    %v906 = vpop.f32.mrf.mxu0
    %907 = vmatprep.mubr.bf16.mxu0 0
    %908 = vmatmul.mubr.bf16.gmra.mxu0 %v795
    %v909 = vpop.f32.mrf.mxu0
    %v910 = vadd.f32 %v817, %v909
    %v911 = vpop.f32.mrf.mxu0
    %v912 = vpop.f32.mrf.mxu0
    %v913 = vpop.f32.mrf.mxu0
    %914 = vdwg.mxu0
    %v915 = vmax.f32 %v902, 0.0
    %v916 = vmax.f32 %v905, 0.0
    %v917 = vmax.f32 %v910, 0.0
    %v918 = vpack.c.bf16 %v916, %v915
    %v919 = vpack.c.bf16 %v917, %v917
    %v920 = vld [vmem:[%s7] sm:$0xff]
    %v921 = vld [vmem:[%s7 + $0x8] sm:$0xff]
    %v922 = vld [vmem:[%s7 + $0x10] sm:$0xff]
    %v923 = vld [vmem:[%s7 + $0x18] sm:$0xf]
    %v924 = vld [vmem:[%s7 + $0x1c] sm:$0xff]
    %v925 = vld [vmem:[%s7 + $0x24] sm:$0xff]
    %v926 = vld [vmem:[%s7 + $0x2c] sm:$0xff]
    %v927 = vld [vmem:[%s7 + $0x34] sm:$0xf]
    %v928 = vld [vmem:[%s7 + $0x38] sm:$0xff]
    %v929 = vld [vmem:[%s7 + $0x40] sm:$0xff]
    %v930 = vld [vmem:[%s7 + $0x48] sm:$0xff]
    %v931 = vld [vmem:[%s7 + $0x50] sm:$0xf]
    %v932 = vld [vmem:[%s7 + $0x54] sm:$0xff]
    %v933 = vld [vmem:[%s7 + $0x5c] sm:$0xff]
    %v934 = vld [vmem:[%s7 + $0x64] sm:$0xff]
    %v935 = vld [vmem:[%s7 + $0x6c] sm:$0xf]
    %v936 = vld [vmem:[%s7 + $0x70] sm:$0xff]
    %v937 = vld [vmem:[%s7 + $0x78] sm:$0xff]
    %v938 = vld [vmem:[%s7 + $0x80] sm:$0xff]
    %v939 = vld [vmem:[%s7 + $0x88] sm:$0xf]
    %v940 = vld [vmem:[%s7 + $0x8c] sm:$0xff]
    %v941 = vld [vmem:[%s7 + $0x94] sm:$0xff]
    %v942 = vld [vmem:[%s7 + $0x9c] sm:$0xff]
    %v943 = vld [vmem:[%s7 + $0xa4] sm:$0xf]
    %v944 = vld [vmem:[%s7 + $0xa8] sm:$0xff]
    %v945 = vld [vmem:[%s7 + $0xb0] sm:$0xff]
    %v946 = vld [vmem:[%s7 + $0xb8] sm:$0xff]
    %v947 = vld [vmem:[%s7 + $0xc0] sm:$0xf]
    %v948 = vld [vmem:[%s7 + $0xc4] sm:$0xff]
    %v949 = vld [vmem:[%s7 + $0xcc] sm:$0xff]
    %v950 = vld [vmem:[%s7 + $0xd4] sm:$0xff]
    %v951 = vld [vmem:[%s7 + $0xdc] sm:$0xf]
    %v952 = vld [vmem:[%s7 + $0xe0] sm:$0xff]
    %v953 = vld [vmem:[%s7 + $0xe8] sm:$0xff]
    %v954 = vld [vmem:[%s7 + $0xf0] sm:$0xff]
    %v955 = vld [vmem:[%s7 + $0xf8] sm:$0xf]
    %v956 = vld [vmem:[%s7 + $0xfc] sm:$0xff]
    %v957 = vld [vmem:[%s7 + $0x104] sm:$0xff]
    %v958 = vld [vmem:[%s7 + $0x10c] sm:$0xff]
    %v959 = vld [vmem:[%s7 + $0x114] sm:$0xf]
    %v960 = vld [vmem:[%s7 + $0x118] sm:$0xff]
    %v961 = vld [vmem:[%s7 + $0x120] sm:$0xff]
    %v962 = vld [vmem:[%s7 + $0x128] sm:$0xff]
    %v963 = vld [vmem:[%s7 + $0x130] sm:$0xf]
    %v964 = vld [vmem:[%s7 + $0x134] sm:$0xff]
    %v965 = vld [vmem:[%s7 + $0x13c] sm:$0xff]
    %v966 = vld [vmem:[%s7 + $0x144] sm:$0xff]
    %v967 = vld [vmem:[%s7 + $0x14c] sm:$0xf]
    %v968 = vld [vmem:[%s7 + $0x150] sm:$0xff]
    %v969 = vld [vmem:[%s7 + $0x158] sm:$0xff]
    %v970 = vld [vmem:[%s7 + $0x160] sm:$0xff]
    %v971 = vld [vmem:[%s7 + $0x168] sm:$0xf]
    %v972 = vld [vmem:[%s7 + $0x16c] sm:$0xff]
    %v973 = vld [vmem:[%s7 + $0x174] sm:$0xff]
    %v974 = vld [vmem:[%s7 + $0x17c] sm:$0xff]
    %v975 = vld [vmem:[%s7 + $0x184] sm:$0xf]
    %v976 = vld [vmem:[%s7 + $0x188] sm:$0xff]
    %v977 = vld [vmem:[%s7 + $0x190] sm:$0xff]
    %v978 = vld [vmem:[%s7 + $0x198] sm:$0xff]
    %v979 = vld [vmem:[%s7 + $0x1a0] sm:$0xf]
    %v980 = vld [vmem:[%s7 + $0x1a4] sm:$0xff]
    %v981 = vld [vmem:[%s7 + $0x1ac] sm:$0xff]
    %v982 = vld [vmem:[%s7 + $0x1b4] sm:$0xff]
    %v983 = vld [vmem:[%s7 + $0x1bc] sm:$0xf]
    %v984 = vld [vmem:[%s8] sm:$0x7f]
    %v986 = vlaneseq
    %v987 = vshrl.u32 %v986, 7
    %v988 = vsub.s32 0, %v987
    %v989 = vrot.slane %v984, %v988
    %v990 = vlaneseq
    %v991 = vshrl.u32 %v990, 7
    %v992 = vsub.s32 1, %v991
    %v993 = vrot.slane %v984, %v992
    %v994 = vlaneseq
    %v995 = vshrl.u32 %v994, 7
    %v996 = vsub.s32 2, %v995
    %v997 = vrot.slane %v984, %v996
    %v998 = vlaneseq
    %v999 = vshrl.u32 %v998, 7
    %v1000 = vsub.s32 3, %v999
    %v1001 = vrot.slane %v984, %v1000
    %v1002 = vlaneseq
    %v1003 = vshrl.u32 %v1002, 7
    %v1004 = vsub.s32 4, %v1003
    %v1005 = vrot.slane %v984, %v1004
    %v1006 = vlaneseq
    %v1007 = vshrl.u32 %v1006, 7
    %v1008 = vsub.s32 5, %v1007
    %v1009 = vrot.slane %v984, %v1008
    %v1010 = vlaneseq
    %v1011 = vshrl.u32 %v1010, 7
    %v1012 = vsub.s32 6, %v1011
    %v1013 = vrot.slane %v984, %v1012
    %v1085 = vunpack.c.l.b16 %v920
    %v1086 = vunpack.c.h.b16 %v920
    %v1087 = vunpack.c.l.b16 %v921
    %v1088 = vunpack.c.h.b16 %v921
    %v1089 = vunpack.c.l.b16 %v922
    %v1090 = vunpack.c.h.b16 %v922
    %v1091 = vunpack.c.l.b16 %v923
    %v1092 = vunpack.c.l.b16 %v924
    %v1093 = vunpack.c.h.b16 %v924
    %v1094 = vunpack.c.l.b16 %v925
    %v1095 = vunpack.c.h.b16 %v925
    %v1096 = vunpack.c.l.b16 %v926
    %v1097 = vunpack.c.h.b16 %v926
    %v1098 = vunpack.c.l.b16 %v927
    %v1099 = vunpack.c.l.b16 %v928
    %v1100 = vunpack.c.h.b16 %v928
    %v1101 = vunpack.c.l.b16 %v929
    %v1102 = vunpack.c.h.b16 %v929
    %v1103 = vunpack.c.l.b16 %v930
    %v1104 = vunpack.c.h.b16 %v930
    %v1105 = vunpack.c.l.b16 %v931
    %v1106 = vunpack.c.l.b16 %v932
    %v1107 = vunpack.c.h.b16 %v932
    %v1108 = vunpack.c.l.b16 %v933
    %v1109 = vunpack.c.h.b16 %v933
    %v1110 = vunpack.c.l.b16 %v934
    %v1111 = vunpack.c.h.b16 %v934
    %v1112 = vunpack.c.l.b16 %v935
    %v1113 = vunpack.c.l.b16 %v936
    %v1114 = vunpack.c.h.b16 %v936
    %v1115 = vunpack.c.l.b16 %v937
    %v1116 = vunpack.c.h.b16 %v937
    %v1117 = vunpack.c.l.b16 %v938
    %v1118 = vunpack.c.h.b16 %v938
    %v1119 = vunpack.c.l.b16 %v939
    %v1120 = vunpack.c.l.b16 %v940
    %v1121 = vunpack.c.h.b16 %v940
    %v1122 = vunpack.c.l.b16 %v941
    %v1123 = vunpack.c.h.b16 %v941
    %v1124 = vunpack.c.l.b16 %v942
    %v1125 = vunpack.c.h.b16 %v942
    %v1126 = vunpack.c.l.b16 %v943
    %v1127 = vunpack.c.l.b16 %v944
    %v1128 = vunpack.c.h.b16 %v944
    %v1129 = vunpack.c.l.b16 %v945
    %v1130 = vunpack.c.h.b16 %v945
    %v1131 = vunpack.c.l.b16 %v946
    %v1132 = vunpack.c.h.b16 %v946
    %v1133 = vunpack.c.l.b16 %v947
    %v1134 = vunpack.c.l.b16 %v948
    %v1135 = vunpack.c.h.b16 %v948
    %v1136 = vunpack.c.l.b16 %v949
    %v1137 = vunpack.c.h.b16 %v949
    %v1138 = vunpack.c.l.b16 %v950
    %v1139 = vunpack.c.h.b16 %v950
    %v1140 = vunpack.c.l.b16 %v951
    %v1141 = vunpack.c.l.b16 %v952
    %v1142 = vunpack.c.h.b16 %v952
    %v1143 = vunpack.c.l.b16 %v953
    %v1144 = vunpack.c.h.b16 %v953
    %v1145 = vunpack.c.l.b16 %v954
    %v1146 = vunpack.c.h.b16 %v954
    %v1147 = vunpack.c.l.b16 %v955
    %v1148 = vunpack.c.l.b16 %v956
    %v1149 = vunpack.c.h.b16 %v956
    %v1150 = vunpack.c.l.b16 %v957
    %v1151 = vunpack.c.h.b16 %v957
    %v1152 = vunpack.c.l.b16 %v958
    %v1153 = vunpack.c.h.b16 %v958
    %v1154 = vunpack.c.l.b16 %v959
    %v1155 = vunpack.c.l.b16 %v960
    %v1156 = vunpack.c.h.b16 %v960
    %v1157 = vunpack.c.l.b16 %v961
    %v1158 = vunpack.c.h.b16 %v961
    %v1159 = vunpack.c.l.b16 %v962
    %v1160 = vunpack.c.h.b16 %v962
    %v1161 = vunpack.c.l.b16 %v963
    %v1162 = vunpack.c.l.b16 %v964
    %v1163 = vunpack.c.h.b16 %v964
    %v1164 = vunpack.c.l.b16 %v965
    %v1165 = vunpack.c.h.b16 %v965
    %v1166 = vunpack.c.l.b16 %v966
    %v1167 = vunpack.c.h.b16 %v966
    %v1168 = vunpack.c.l.b16 %v967
    %v1169 = vunpack.c.l.b16 %v968
    %v1170 = vunpack.c.h.b16 %v968
    %v1171 = vunpack.c.l.b16 %v969
    %v1172 = vunpack.c.h.b16 %v969
    %v1173 = vunpack.c.l.b16 %v970
    %v1174 = vunpack.c.h.b16 %v970
    %v1175 = vunpack.c.l.b16 %v971
    %v1176 = vunpack.c.l.b16 %v972
    %v1177 = vunpack.c.h.b16 %v972
    %v1178 = vunpack.c.l.b16 %v973
    %v1179 = vunpack.c.h.b16 %v973
    %v1180 = vunpack.c.l.b16 %v974
    %v1181 = vunpack.c.h.b16 %v974
    %v1182 = vunpack.c.l.b16 %v975
    %v1183 = vunpack.c.l.b16 %v976
    %v1184 = vunpack.c.h.b16 %v976
    %v1185 = vunpack.c.l.b16 %v977
    %v1186 = vunpack.c.h.b16 %v977
    %v1187 = vunpack.c.l.b16 %v978
    %v1188 = vunpack.c.h.b16 %v978
    %v1189 = vunpack.c.l.b16 %v979
    %v1190 = vunpack.c.l.b16 %v980
    %v1191 = vunpack.c.h.b16 %v980
    %v1192 = vunpack.c.l.b16 %v981
    %v1193 = vunpack.c.h.b16 %v981
    %v1194 = vunpack.c.l.b16 %v982
    %v1195 = vunpack.c.h.b16 %v982
    %v1196 = vunpack.c.l.b16 %v983
    %v1197 = vpack.c.b16 %v1092, %v1085
    %v1198 = vpack.c.b16 %v1093, %v1086
    %v1199 = vpack.c.b16 %v1094, %v1087
    %v1200 = vpack.c.b16 %v1095, %v1088
    %v1201 = vpack.c.b16 %v1096, %v1089
    %v1202 = vpack.c.b16 %v1097, %v1090
    %v1203 = vpack.c.b16 %v1098, %v1091
    %v1204 = vpack.c.b16 %v1106, %v1099
    %v1205 = vpack.c.b16 %v1107, %v1100
    %v1206 = vpack.c.b16 %v1108, %v1101
    %v1207 = vpack.c.b16 %v1109, %v1102
    %v1208 = vpack.c.b16 %v1110, %v1103
    %v1209 = vpack.c.b16 %v1111, %v1104
    %v1210 = vpack.c.b16 %v1112, %v1105
    %v1211 = vpack.c.b16 %v1120, %v1113
    %v1212 = vpack.c.b16 %v1121, %v1114
    %v1213 = vpack.c.b16 %v1122, %v1115
    %v1214 = vpack.c.b16 %v1123, %v1116
    %v1215 = vpack.c.b16 %v1124, %v1117
    %v1216 = vpack.c.b16 %v1125, %v1118
    %v1217 = vpack.c.b16 %v1126, %v1119
    %v1218 = vpack.c.b16 %v1134, %v1127
    %v1219 = vpack.c.b16 %v1135, %v1128
    %v1220 = vpack.c.b16 %v1136, %v1129
    %v1221 = vpack.c.b16 %v1137, %v1130
    %v1222 = vpack.c.b16 %v1138, %v1131
    %v1223 = vpack.c.b16 %v1139, %v1132
    %v1224 = vpack.c.b16 %v1140, %v1133
    %v1225 = vpack.c.b16 %v1148, %v1141
    %v1226 = vpack.c.b16 %v1149, %v1142
    %v1227 = vpack.c.b16 %v1150, %v1143
    %v1228 = vpack.c.b16 %v1151, %v1144
    %v1229 = vpack.c.b16 %v1152, %v1145
    %v1230 = vpack.c.b16 %v1153, %v1146
    %v1231 = vpack.c.b16 %v1154, %v1147
    %v1232 = vpack.c.b16 %v1162, %v1155
    %v1233 = vpack.c.b16 %v1163, %v1156
    %v1234 = vpack.c.b16 %v1164, %v1157
    %v1235 = vpack.c.b16 %v1165, %v1158
    %v1236 = vpack.c.b16 %v1166, %v1159
    %v1237 = vpack.c.b16 %v1167, %v1160
    %v1238 = vpack.c.b16 %v1168, %v1161
    %v1239 = vpack.c.b16 %v1176, %v1169
    %v1240 = vpack.c.b16 %v1177, %v1170
    %v1241 = vpack.c.b16 %v1178, %v1171
    %v1242 = vpack.c.b16 %v1179, %v1172
    %v1243 = vpack.c.b16 %v1180, %v1173
    %v1244 = vpack.c.b16 %v1181, %v1174
    %v1245 = vpack.c.b16 %v1182, %v1175
    %v1246 = vpack.c.b16 %v1190, %v1183
    %v1247 = vpack.c.b16 %v1191, %v1184
    %v1248 = vpack.c.b16 %v1192, %v1185
    %v1249 = vpack.c.b16 %v1193, %v1186
    %v1250 = vpack.c.b16 %v1194, %v1187
    %v1251 = vpack.c.b16 %v1195, %v1188
    %v1252 = vpack.c.b16 %v1196, %v1189
    %1309 = vmatprep.subr.bf16.mxu0 %v1247
    %1310 = vmatpush1.bf16.msra.mxu0 %v1246
    %1311 = vmatprep.subr.bf16.mxu0 %v1240
    %1312 = vmatpush1.bf16.msra.mxu0 %v1239
    %1313 = vmatprep.subr.bf16.mxu0 %v1233
    %1314 = vmatpush1.bf16.msra.mxu0 %v1232
    %1315 = vmatprep.subr.bf16.mxu0 %v1226
    %1316 = vmatpush1.bf16.msra.mxu0 %v1225
    %1317 = vmatprep.subr.bf16.mxu0 %v1219
    %1318 = vmatpush1.bf16.msra.mxu0 %v1218
    %1319 = vmatprep.subr.bf16.mxu0 %v1212
    %1320 = vmatpush1.bf16.msra.mxu0 %v1211
    %1321 = vmatprep.subr.bf16.mxu0 %v1205
    %1322 = vmatpush1.bf16.msra.mxu0 %v1204
    %1323 = vmatprep.subr.bf16.mxu0 %v1198
    %1324 = vmatpush1.bf16.msra.mxu0 %v1197
    %1325 = vmatprep.subr.bf16.mxu0 0
    %1326 = vmatpush2.bf16.msra.mxu0 0
    %1327 = vmatprep.subr.bf16.mxu0 0
    %1328 = vmatpush2.bf16.msra.mxu0 0
    %1329 = vmatprep.subr.bf16.mxu0 0
    %1330 = vmatpush2.bf16.msra.mxu0 0
    %1331 = vmatprep.subr.bf16.mxu0 0
    %1332 = vmatpush2.bf16.msra.mxu0 0
    %1333 = vmatprep.subr.bf16.mxu0 0
    %1334 = vmatpush2.bf16.msra.mxu0 0
    %1335 = vmatprep.subr.bf16.mxu0 0
    %1336 = vmatpush2.bf16.msra.mxu0 0
    %1337 = vmatprep.subr.bf16.mxu0 0
    %1338 = vmatpush2.bf16.msra.mxu0 0
    %1339 = vmatprep.subr.bf16.mxu0 0
    %1340 = vmatpush2.bf16.msra.mxu0 0
    %1341 = vmatprep.mubr.bf16.mxu0 0
    %1342 = vmatmul.mubr.bf16.gmra.mxu0 %v918
    %v1343 = vpop.f32.mrf.mxu0
    %v1344 = vadd.f32 %v989, %v1343
    %v1345 = vpop.f32.mrf.mxu0
    %v1346 = vadd.f32 %v993, %v1345
    %v1347 = vpop.f32.mrf.mxu0
    %v1348 = vadd.f32 %v989, %v1347
    %v1349 = vpop.f32.mrf.mxu0
    %v1350 = vadd.f32 %v993, %v1349
    %1351 = vmatprep.mubr.bf16.mxu0 0
    %1352 = vmatmul.mubr.bf16.gmra.mxu0 %v919
    %v1353 = vpop.f32.mrf.mxu0
    %v1354 = vadd.f32 %v989, %v1353
    %v1355 = vpop.f32.mrf.mxu0
    %v1356 = vadd.f32 %v993, %v1355
    %v1357 = vpop.f32.mrf.mxu0
    %v1358 = vpop.f32.mrf.mxu0
    %1359 = vdwg.mxu0
    %1360 = vmatprep.subr.bf16.mxu0 %v1249
    %1361 = vmatpush1.bf16.msra.mxu0 %v1248
    %1362 = vmatprep.subr.bf16.mxu0 %v1242
    %1363 = vmatpush1.bf16.msra.mxu0 %v1241
    %1364 = vmatprep.subr.bf16.mxu0 %v1235
    %1365 = vmatpush1.bf16.msra.mxu0 %v1234
    %1366 = vmatprep.subr.bf16.mxu0 %v1228
    %1367 = vmatpush1.bf16.msra.mxu0 %v1227
    %1368 = vmatprep.subr.bf16.mxu0 %v1221
    %1369 = vmatpush1.bf16.msra.mxu0 %v1220
    %1370 = vmatprep.subr.bf16.mxu0 %v1214
    %1371 = vmatpush1.bf16.msra.mxu0 %v1213
    %1372 = vmatprep.subr.bf16.mxu0 %v1207
    %1373 = vmatpush1.bf16.msra.mxu0 %v1206
    %1374 = vmatprep.subr.bf16.mxu0 %v1200
    %1375 = vmatpush1.bf16.msra.mxu0 %v1199
    %1376 = vmatprep.subr.bf16.mxu0 0
    %1377 = vmatpush2.bf16.msra.mxu0 0
    %1378 = vmatprep.subr.bf16.mxu0 0
    %1379 = vmatpush2.bf16.msra.mxu0 0
    %1380 = vmatprep.subr.bf16.mxu0 0
    %1381 = vmatpush2.bf16.msra.mxu0 0
    %1382 = vmatprep.subr.bf16.mxu0 0
    %1383 = vmatpush2.bf16.msra.mxu0 0
    %1384 = vmatprep.subr.bf16.mxu0 0
    %1385 = vmatpush2.bf16.msra.mxu0 0
    %1386 = vmatprep.subr.bf16.mxu0 0
    %1387 = vmatpush2.bf16.msra.mxu0 0
    %1388 = vmatprep.subr.bf16.mxu0 0
    %1389 = vmatpush2.bf16.msra.mxu0 0
    %1390 = vmatprep.subr.bf16.mxu0 0
    %1391 = vmatpush2.bf16.msra.mxu0 0
    %1392 = vmatprep.mubr.bf16.mxu0 0
    %1393 = vmatmul.mubr.bf16.gmra.mxu0 %v918
    %v1394 = vpop.f32.mrf.mxu0
    %v1395 = vadd.f32 %v997, %v1394
    %v1396 = vpop.f32.mrf.mxu0
    %v1397 = vadd.f32 %v1001, %v1396
    %v1398 = vpop.f32.mrf.mxu0
    %v1399 = vadd.f32 %v997, %v1398
    %v1400 = vpop.f32.mrf.mxu0
    %v1401 = vadd.f32 %v1001, %v1400
    %1402 = vmatprep.mubr.bf16.mxu0 0
    %1403 = vmatmul.mubr.bf16.gmra.mxu0 %v919
    %v1404 = vpop.f32.mrf.mxu0
    %v1405 = vadd.f32 %v997, %v1404
    %v1406 = vpop.f32.mrf.mxu0
    %v1407 = vadd.f32 %v1001, %v1406
    %v1408 = vpop.f32.mrf.mxu0
    %v1409 = vpop.f32.mrf.mxu0
    %1410 = vdwg.mxu0
    %1411 = vmatprep.subr.bf16.mxu0 %v1251
    %1412 = vmatpush1.bf16.msra.mxu0 %v1250
    %1413 = vmatprep.subr.bf16.mxu0 %v1244
    %1414 = vmatpush1.bf16.msra.mxu0 %v1243
    %1415 = vmatprep.subr.bf16.mxu0 %v1237
    %1416 = vmatpush1.bf16.msra.mxu0 %v1236
    %1417 = vmatprep.subr.bf16.mxu0 %v1230
    %1418 = vmatpush1.bf16.msra.mxu0 %v1229
    %1419 = vmatprep.subr.bf16.mxu0 %v1223
    %1420 = vmatpush1.bf16.msra.mxu0 %v1222
    %1421 = vmatprep.subr.bf16.mxu0 %v1216
    %1422 = vmatpush1.bf16.msra.mxu0 %v1215
    %1423 = vmatprep.subr.bf16.mxu0 %v1209
    %1424 = vmatpush1.bf16.msra.mxu0 %v1208
    %1425 = vmatprep.subr.bf16.mxu0 %v1202
    %1426 = vmatpush1.bf16.msra.mxu0 %v1201
    %1427 = vmatprep.subr.bf16.mxu0 0
    %1428 = vmatpush2.bf16.msra.mxu0 0
    %1429 = vmatprep.subr.bf16.mxu0 0
    %1430 = vmatpush2.bf16.msra.mxu0 0
    %1431 = vmatprep.subr.bf16.mxu0 0
    %1432 = vmatpush2.bf16.msra.mxu0 0
    %1433 = vmatprep.subr.bf16.mxu0 0
    %1434 = vmatpush2.bf16.msra.mxu0 0
    %1435 = vmatprep.subr.bf16.mxu0 0
    %1436 = vmatpush2.bf16.msra.mxu0 0
    %1437 = vmatprep.subr.bf16.mxu0 0
    %1438 = vmatpush2.bf16.msra.mxu0 0
    %1439 = vmatprep.subr.bf16.mxu0 0
    %1440 = vmatpush2.bf16.msra.mxu0 0
    %1441 = vmatprep.subr.bf16.mxu0 0
    %1442 = vmatpush2.bf16.msra.mxu0 0
    %1443 = vmatprep.mubr.bf16.mxu0 0
    %1444 = vmatmul.mubr.bf16.gmra.mxu0 %v918
    %v1445 = vpop.f32.mrf.mxu0
    %v1446 = vadd.f32 %v1005, %v1445
    %v1447 = vpop.f32.mrf.mxu0
    %v1448 = vadd.f32 %v1009, %v1447
    %v1449 = vpop.f32.mrf.mxu0
    %v1450 = vadd.f32 %v1005, %v1449
    %v1451 = vpop.f32.mrf.mxu0
    %v1452 = vadd.f32 %v1009, %v1451
    %1453 = vmatprep.mubr.bf16.mxu0 0
    %1454 = vmatmul.mubr.bf16.gmra.mxu0 %v919
    %v1455 = vpop.f32.mrf.mxu0
    %v1456 = vadd.f32 %v1005, %v1455
    %v1457 = vpop.f32.mrf.mxu0
    %v1458 = vadd.f32 %v1009, %v1457
    %v1459 = vpop.f32.mrf.mxu0
    %v1460 = vpop.f32.mrf.mxu0
    %1461 = vdwg.mxu0
    %1462 = vmatprep.subr.bf16.mxu0 0
    %1463 = vmatpush1.bf16.msra.mxu0 %v1252
    %1464 = vmatprep.subr.bf16.mxu0 0
    %1465 = vmatpush1.bf16.msra.mxu0 %v1245
    %1466 = vmatprep.subr.bf16.mxu0 0
    %1467 = vmatpush1.bf16.msra.mxu0 %v1238
    %1468 = vmatprep.subr.bf16.mxu0 0
    %1469 = vmatpush1.bf16.msra.mxu0 %v1231
    %1470 = vmatprep.subr.bf16.mxu0 0
    %1471 = vmatpush1.bf16.msra.mxu0 %v1224
    %1472 = vmatprep.subr.bf16.mxu0 0
    %1473 = vmatpush1.bf16.msra.mxu0 %v1217
    %1474 = vmatprep.subr.bf16.mxu0 0
    %1475 = vmatpush1.bf16.msra.mxu0 %v1210
    %1476 = vmatprep.subr.bf16.mxu0 0
    %1477 = vmatpush1.bf16.msra.mxu0 %v1203
    %1478 = vmatprep.subr.bf16.mxu0 0
    %1479 = vmatpush2.bf16.msra.mxu0 0
    %1480 = vmatprep.subr.bf16.mxu0 0
    %1481 = vmatpush2.bf16.msra.mxu0 0
    %1482 = vmatprep.subr.bf16.mxu0 0
    %1483 = vmatpush2.bf16.msra.mxu0 0
    %1484 = vmatprep.subr.bf16.mxu0 0
    %1485 = vmatpush2.bf16.msra.mxu0 0
    %1486 = vmatprep.subr.bf16.mxu0 0
    %1487 = vmatpush2.bf16.msra.mxu0 0
    %1488 = vmatprep.subr.bf16.mxu0 0
    %1489 = vmatpush2.bf16.msra.mxu0 0
    %1490 = vmatprep.subr.bf16.mxu0 0
    %1491 = vmatpush2.bf16.msra.mxu0 0
    %1492 = vmatprep.subr.bf16.mxu0 0
    %1493 = vmatpush2.bf16.msra.mxu0 0
    %1494 = vmatprep.mubr.bf16.mxu0 0
    %1495 = vmatmul.mubr.bf16.gmra.mxu0 %v918
    %v1496 = vpop.f32.mrf.mxu0
    %v1497 = vadd.f32 %v1013, %v1496
    %v1498 = vpop.f32.mrf.mxu0
    %v1499 = vpop.f32.mrf.mxu0
    %v1500 = vadd.f32 %v1013, %v1499
    %v1501 = vpop.f32.mrf.mxu0
    %1502 = vmatprep.mubr.bf16.mxu0 0
    %1503 = vmatmul.mubr.bf16.gmra.mxu0 %v919
    %v1504 = vpop.f32.mrf.mxu0
    %v1505 = vadd.f32 %v1013, %v1504
    %v1506 = vpop.f32.mrf.mxu0
    %v1507 = vpop.f32.mrf.mxu0
    %v1508 = vpop.f32.mrf.mxu0
    %1509 = vdwg.mxu0
    %v1510 = vmul.f32 %v1344, 0.5
    %v1511 = vmul.f32 %v1346, 0.5
    %v1512 = vmul.f32 %v1395, 0.5
    %v1513 = vmul.f32 %v1397, 0.5
    %v1514 = vmul.f32 %v1446, 0.5
    %v1515 = vmul.f32 %v1448, 0.5
    %v1516 = vmul.f32 %v1497, 0.5
    %v1517 = vmul.f32 %v1348, 0.5
    %v1518 = vmul.f32 %v1350, 0.5
    %v1519 = vmul.f32 %v1399, 0.5
    %v1520 = vmul.f32 %v1401, 0.5
    %v1521 = vmul.f32 %v1450, 0.5
    %v1522 = vmul.f32 %v1452, 0.5
    %v1523 = vmul.f32 %v1500, 0.5
    %v1524 = vmul.f32 %v1354, 0.5
    %v1525 = vmul.f32 %v1356, 0.5
    %v1526 = vmul.f32 %v1405, 0.5
    %v1527 = vmul.f32 %v1407, 0.5
    %v1528 = vmul.f32 %v1456, 0.5
    %v1529 = vmul.f32 %v1458, 0.5
    %v1530 = vmul.f32 %v1505, 0.5
    %v1531 = vtanh.pop %v1510
    %v1532 = vtanh.pop %v1511
    %v1533 = vtanh.pop %v1512
    %v1534 = vtanh.pop %v1513
    %v1535 = vtanh.pop %v1514
    %v1536 = vtanh.pop %v1515
    %v1537 = vtanh.pop %v1516
    %v1538 = vtanh.pop %v1517
    %v1539 = vtanh.pop %v1518
    %v1540 = vtanh.pop %v1519
    %v1541 = vtanh.pop %v1520
    %v1542 = vtanh.pop %v1521
    %v1543 = vtanh.pop %v1522
    %v1544 = vtanh.pop %v1523
    %v1545 = vtanh.pop %v1524
    %v1546 = vtanh.pop %v1525
    %v1547 = vtanh.pop %v1526
    %v1548 = vtanh.pop %v1527
    %v1549 = vtanh.pop %v1528
    %v1550 = vtanh.pop %v1529
    %v1551 = vtanh.pop %v1530
    %v1552 = vmul.f32 %v1531, 0.5
    %v1553 = vmul.f32 %v1532, 0.5
    %v1554 = vmul.f32 %v1533, 0.5
    %v1555 = vmul.f32 %v1534, 0.5
    %v1556 = vmul.f32 %v1535, 0.5
    %v1557 = vmul.f32 %v1536, 0.5
    %v1558 = vmul.f32 %v1537, 0.5
    %v1559 = vmul.f32 %v1538, 0.5
    %v1560 = vmul.f32 %v1539, 0.5
    %v1561 = vmul.f32 %v1540, 0.5
    %v1562 = vmul.f32 %v1541, 0.5
    %v1563 = vmul.f32 %v1542, 0.5
    %v1564 = vmul.f32 %v1543, 0.5
    %v1565 = vmul.f32 %v1544, 0.5
    %v1566 = vmul.f32 %v1545, 0.5
    %v1567 = vmul.f32 %v1546, 0.5
    %v1568 = vmul.f32 %v1547, 0.5
    %v1569 = vmul.f32 %v1548, 0.5
    %v1570 = vmul.f32 %v1549, 0.5
    %v1571 = vmul.f32 %v1550, 0.5
    %v1572 = vmul.f32 %v1551, 0.5
    %v1573 = vadd.f32 %v1552, 0.5
    %v1574 = vadd.f32 %v1553, 0.5
    %v1575 = vadd.f32 %v1554, 0.5
    %v1576 = vadd.f32 %v1555, 0.5
    %v1577 = vadd.f32 %v1556, 0.5
    %v1578 = vadd.f32 %v1557, 0.5
    %v1579 = vadd.f32 %v1558, 0.5
    %v1580 = vadd.f32 %v1559, 0.5
    %v1581 = vadd.f32 %v1560, 0.5
    %v1582 = vadd.f32 %v1561, 0.5
    %v1583 = vadd.f32 %v1562, 0.5
    %v1584 = vadd.f32 %v1563, 0.5
    %v1585 = vadd.f32 %v1564, 0.5
    %v1586 = vadd.f32 %v1565, 0.5
    %v1587 = vadd.f32 %v1566, 0.5
    %v1588 = vadd.f32 %v1567, 0.5
    %v1589 = vadd.f32 %v1568, 0.5
    %v1590 = vadd.f32 %v1569, 0.5
    %v1591 = vadd.f32 %v1570, 0.5
    %v1592 = vadd.f32 %v1571, 0.5
    %v1593 = vadd.f32 %v1572, 0.5
    %1594 = vst [vmem:[#allocation2] sm:$0xff] %v1573
    %1595 = vst [vmem:[#allocation2 + $0x8] sm:$0xff] %v1574
    %1596 = vst [vmem:[#allocation2 + $0x10] sm:$0xff] %v1575
    %1597 = vst [vmem:[#allocation2 + $0x18] sm:$0xff] %v1576
    %1598 = vst [vmem:[#allocation2 + $0x20] sm:$0xff] %v1577
    %1599 = vst [vmem:[#allocation2 + $0x28] sm:$0xff] %v1578
    %1600 = vst.msk [vmem:[#allocation2 + $0x30] sm:$0xff] %vm468, %v1579
    %1601 = vst [vmem:[#allocation2 + $0x38] sm:$0xff] %v1580
    %1602 = vst [vmem:[#allocation2 + $0x40] sm:$0xff] %v1581
    %1603 = vst [vmem:[#allocation2 + $0x48] sm:$0xff] %v1582
    %1604 = vst [vmem:[#allocation2 + $0x50] sm:$0xff] %v1583
    %1605 = vst [vmem:[#allocation2 + $0x58] sm:$0xff] %v1584
    %1606 = vst [vmem:[#allocation2 + $0x60] sm:$0xff] %v1585
    %1607 = vst.msk [vmem:[#allocation2 + $0x68] sm:$0xff] %vm468, %v1586
    %1608 = vst [vmem:[#allocation2 + $0x70] sm:$0xff] %v1587
    %1609 = vst [vmem:[#allocation2 + $0x78] sm:$0xff] %v1588
    %1610 = vst [vmem:[#allocation2 + $0x80] sm:$0xff] %v1589
    %1611 = vst [vmem:[#allocation2 + $0x88] sm:$0xff] %v1590
    %1612 = vst [vmem:[#allocation2 + $0x90] sm:$0xff] %v1591
    %1613 = vst [vmem:[#allocation2 + $0x98] sm:$0xff] %v1592
    %1614 = vst.msk [vmem:[#allocation2 + $0xa0] sm:$0xff] %vm468, %v1593
    // Predicated region
    $region38: #{toy_enc_dec_forward.1} parent=1 // pred_check
      _
    $region39: #{toy_enc_dec_forward.1} parent=1 // pred_check_branch
      %1616 = sbr.rel (0) target = $region41
    $region40: #{toy_enc_dec_forward.1} parent=1 // pred_region
      %s1618 = ssub.s32 2688, 2688
      %1619 = vsyncadd [#allocation3], %s1618
      %s1620 = sshll.u32 [#allocation2], 4
      %s1621 = int_to_ptr.vmem [resolvable:$true] %s1620
      %1626 = dma.vmem_to_hbm [thread:$0]  %s1621, 2688, %s9, [#allocation3], 896, 896, 56
    $region41: #{toy_enc_dec_forward.1} parent=1 // pred_fallthru
      _
    // Predicated region
    $region42: #{toy_enc_dec_forward.1} parent=1 // pred_check
      _
    $region43: #{toy_enc_dec_forward.1} parent=1 // pred_check_branch
      %1628 = sbr.rel (0) target = $region45
    $region44: #{toy_enc_dec_forward.1} parent=1 // pred_region
      %1629 = dma.done [#allocation3], 2688
    $region45: #{toy_enc_dec_forward.1} parent=1 // pred_fallthru
      _
    %1630 = vsyncpa [#allocation3], 1

</llo_original>
